<compile_context>
chip_gen: v7x
topology: tpu7x:2x2x1
jax: 0.10.0
libtpu: 0.0.40
codegen_flags: <defaults>
</compile_context>

<pallas_src>
import functools

import jax
import jax.numpy as jnp
from jax.experimental import pallas as pl
from jax.experimental.pallas import tpu as pltpu


# --------------------------------------------------------------------------
# Kernel core
# --------------------------------------------------------------------------
def _attention_core(x_q, x_k, x_v, mask, w_ref, b_ref, out_ref, *,
                    H, D, N, Bt, approx_recip):
    """x_q/x_k/x_v: (Bt*N, C) values.  mask: (Bt, N, N) in input dtype or None."""
    f32 = jnp.float32
    in_dt = x_q.dtype
    G = H * Bt                      # (head, batch) groups, head-major: g = h*Bt + b

    # Wide fused projections — single (Bt*N, C) @ (C, C) MXU matmuls.
    # Softmax scale is pre-folded into w[0] / b[0] by the wrapper.
    q = (jnp.dot(x_q, w_ref[0], preferred_element_type=f32) + b_ref[0]).astype(in_dt)
    k = (jnp.dot(x_k, w_ref[1], preferred_element_type=f32) + b_ref[1]).astype(in_dt)
    v = (jnp.dot(x_v, w_ref[2], preferred_element_type=f32) + b_ref[2]).astype(in_dt)

    # Head split: O(H) lane slices + one leading-axis concat per tensor.
    # (Avoids the previous O(Bt*H) per-(batch, head) sub-tile slicing/stack.)
    def split_heads(x):                                   # (Bt*N, C) -> (G, N, D)
        parts = [x[:, h * D:(h + 1) * D] for h in range(H)]
        return jnp.concatenate(parts, axis=0).reshape(G, N, D)

    qh = split_heads(q)
    kh = split_heads(k)
    vh = split_heads(v)

    # Scores for all groups in one batched matmul (canonical Mosaic pattern).
    # NOTE: a pre-transposed (G, D, N) K feed was considered; the canonical
    # contraction is kept for lowering robustness.
    s = jnp.einsum("gnd,gmd->gnm", qh, kh, preferred_element_type=f32)  # (G, N, N)

    if mask is not None:
        # Raw mask (0 => masked out) in the input dtype; tile over heads with a
        # single leading concat (head-major groups), cheap VPU compare/select.
        mask_g = jnp.concatenate([mask] * H, axis=0) if H > 1 else mask  # (G, N, N)
        s = jnp.where(mask_g == 0, jnp.float32(-1e9), s)

    # Numerically stable softmax in f32.
    s = s - jnp.max(s, axis=-1, keepdims=True)
    e = jnp.exp(s)
    denom = jnp.sum(e, axis=-1, keepdims=True)
    if approx_recip:
        p = e * pl.reciprocal(denom, approx=True)   # EUP slot, ~1e-3 rel error
    else:
        p = e / denom                               # exact (f32 parity)
    p = p.astype(in_dt)

    # Attention output for all groups: (G, N, N) @ (G, N, D) -> (G, N, D).
    o = jnp.einsum("gnm,gmd->gnd", p, vh, preferred_element_type=f32).astype(in_dt)

    # Head recombine: O(H) leading-dim slices + one lane concat -> (Bt*N, C).
    ctx = jnp.concatenate(
        [o[h * Bt:(h + 1) * Bt].reshape(Bt * N, D) for h in range(H)], axis=-1)

    out = jnp.dot(ctx, w_ref[3], preferred_element_type=f32) + b_ref[3]
    out_ref[...] = out.astype(out_ref.dtype)


def _mhsa_kernel(H, D, N, Bt, approx, q_ref, k_ref, v_ref, w_ref, b_ref, out_ref):
    _attention_core(q_ref[...], k_ref[...], v_ref[...], None,
                    w_ref, b_ref, out_ref, H=H, D=D, N=N, Bt=Bt,
                    approx_recip=approx)


def _mhsa_kernel_masked(H, D, N, Bt, approx, q_ref, k_ref, v_ref, m_ref,
                        w_ref, b_ref, out_ref):
    _attention_core(q_ref[...], k_ref[...], v_ref[...], m_ref[...],
                    w_ref, b_ref, out_ref, H=H, D=D, N=N, Bt=Bt,
                    approx_recip=approx)


# --------------------------------------------------------------------------
# VMEM planning / batch-tile selection
# --------------------------------------------------------------------------
def _vmem_plan():
    """(vmem_limit_bytes, per-step tile budget), generation-aware."""
    try:
        cap = int(pltpu.get_tpu_info().vmem_capacity_bytes)   # 128 MiB v5e/v6e, 64 MiB v7x
    except Exception:
        cap = 64 * 1024 * 1024                                # conservative (v7x-sized)
    vmem_limit = int(cap * 0.7)       # scoped VMEM we ask the compiler for
    budget = int(vmem_limit * 0.7)    # headroom for compiler-internal scratch
    return vmem_limit, budget


def _step_footprint(bt, *, N, C, H, itemsize, has_mask):
    """Conservative per-grid-step VMEM estimate (pipeline buffers + temporaries)."""
    f32b = 4
    rows = bt * N
    G = bt * H
    D = C // H
    # Pipelined blocks (double-buffered by the BlockSpec pipeline):
    blocks = 4 * rows * C * itemsize * 2                  # q, k, v, out blocks
    blocks += (4 * C * C + 4 * C) * itemsize * 2          # packed weights + biases
    # TODO(synk): single-buffer the constant weight block (pl.Buffered(1)) once
    # pipeline_mode support is confirmed on all target jax versions.
    if has_mask:
        blocks += bt * N * N * itemsize * 2
    # In-kernel temporaries (single copy each):
    tmp = 3 * rows * C * (f32b + itemsize)                 # f32 projections + casts
    tmp += 3 * G * N * D * itemsize                        # head-split group tensors
    tmp += G * N * N * (3 * f32b + itemsize)               # scores, exp, probs
    tmp += G * N * D * (itemsize + f32b)                   # attention output
    tmp += rows * C * (itemsize + f32b)                    # ctx + final output
    if has_mask:
        tmp += G * N * N * itemsize                        # head-tiled mask
    return blocks + tmp


def _choose_batch_tile(B, N, C, H, itemsize, has_mask, budget):
    # Dtype-aware sublane alignment: bf16 packs 16 rows/vreg, f32 8, int8 32.
    sub = {4: 8, 2: 16, 1: 32}.get(itemsize, 8)
    valid = [bt for bt in range(1, B + 1)
             if B % bt == 0 and ((bt * N) % sub == 0 or bt == B)]
    fitting = [bt for bt in valid
               if _step_footprint(bt, N=N, C=C, H=H, itemsize=itemsize,
                                  has_mask=has_mask) <= budget]
    if not fitting:
        return min(valid)
    # Prefer >= 2 grid steps (pipeline overlap + both v7x TensorCores busy),
    # then an even step count, then the largest batch tile (fat MXU matmuls).
    return max(fitting, key=lambda bt: (B // bt >= 2, (B // bt) % 2 == 0, bt))


# --------------------------------------------------------------------------
# Wrapper
# --------------------------------------------------------------------------
def multi_head_self_attention(q, k, v, params, *, num_heads, mask=None,
                              approx_recip=None):
    """q, k, v: (B, N, C).  params: (C, C) weights in (in, out) layout, (1, C) biases."""
    B, N, C = q.shape
    H = num_heads
    D = C // H
    scale = float(D) ** (-0.5)
    dt = q.dtype
    itemsize = jnp.dtype(dt).itemsize
    if approx_recip is None:
        approx_recip = dt != jnp.float32   # exact reciprocal for f32 parity

    # Pack all weights/biases into single constant-index operands; fold the
    # softmax scale into the q projection ((x@Wq + bq)*s == x@(s*Wq) + s*bq).
    w = jnp.stack([params["wq"] * scale, params["wk"],
                   params["wv"], params["wo"]], axis=0).astype(dt)      # (4, C, C)
    b = jnp.stack([params["bq"] * scale, params["bk"],
                   params["bv"], params["bo"]], axis=0).astype(dt)      # (4, 1, C)

    vmem_limit, budget = _vmem_plan()
    Bt = _choose_batch_tile(B, N, C, H, itemsize, mask is not None, budget)
    steps = B // Bt

    qf = q.reshape(B * N, C)
    kf = k.reshape(B * N, C)
    vf = v.reshape(B * N, C)

    row_spec = pl.BlockSpec((Bt * N, C), lambda i: (i, 0))
    w_spec = pl.BlockSpec((4, C, C), lambda i: (0, 0, 0))   # constant -> fetched once
    b_spec = pl.BlockSpec((4, 1, C), lambda i: (0, 0, 0))
    out_spec = pl.BlockSpec((Bt * N, C), lambda i: (i, 0))

    if mask is None:
        kernel = functools.partial(_mhsa_kernel, H, D, N, Bt, approx_recip)
        in_specs = [row_spec, row_spec, row_spec, w_spec, b_spec]
        args = (qf, kf, vf, w, b)
    else:
        # Raw mask, cast to the input dtype (halves DMA for bf16); the
        # where(-1e9) select happens in-kernel in f32.
        mask_c = jnp.broadcast_to(mask, (B, N, N)).astype(dt)
        kernel = functools.partial(_mhsa_kernel_masked, H, D, N, Bt, approx_recip)
        mask_spec = pl.BlockSpec((Bt, N, N), lambda i: (i, 0, 0))
        in_specs = [row_spec, row_spec, row_spec, mask_spec, w_spec, b_spec]
        args = (qf, kf, vf, mask_c, w, b)

    out_flat = pl.pallas_call(
        kernel,
        out_shape=jax.ShapeDtypeStruct((B * N, C), dt),
        grid_spec=pltpu.PrefetchScalarGridSpec(
            num_scalar_prefetch=0,
            grid=(steps,),
            in_specs=in_specs,
            out_specs=out_spec,
        ),
        compiler_params=pltpu.CompilerParams(
            dimension_semantics=("parallel",),
            vmem_limit_bytes=vmem_limit),
    )(*args)

    return out_flat.reshape(B, N, C)


# --------------------------------------------------------------------------
# Pure-JAX reference (mirrors the PyTorch forward)
# --------------------------------------------------------------------------
def _reference(q, k, v, params, *, num_heads, mask=None):
    B, N, C = q.shape
    D = C // num_heads
    scale = float(D) ** (-0.5)

    def lin(x, w, b):
        return x @ w + b  # w is (in, out)

    def split(x):
        return x.reshape(B, N, num_heads, D).transpose(0, 2, 1, 3)  # (B,H,N,D)

    qh = split(lin(q, params["wq"], params["bq"]))
    kh = split(lin(k, params["wk"], params["bk"]))
    vh = split(lin(v, params["wv"], params["bv"]))
    attn = jnp.einsum("bhnd,bhmd->bhnm", qh, kh) * scale
    if mask is not None:
        attn = jnp.where(mask[:, None] == 0, -1e9, attn)
    attn = jax.nn.softmax(attn, axis=-1)
    out = jnp.einsum("bhnm,bhmd->bhnd", attn, vh)
    out = out.transpose(0, 2, 1, 3).reshape(B, N, C)
    return lin(out, params["wo"], params["bo"])


def init_params(key, embed_dim):
    keys = jax.random.split(key, 8)
    s = 1.0 / (embed_dim ** 0.5)

    def w(k):
        return jax.random.uniform(k, (embed_dim, embed_dim), jnp.float32, -s, s)

    def b(k):
        return jax.random.uniform(k, (1, embed_dim), jnp.float32, -s, s)

    return {
        "wq": w(keys[0]), "bq": b(keys[1]),
        "wk": w(keys[2]), "bk": b(keys[3]),
        "wv": w(keys[4]), "bv": b(keys[5]),
        "wo": w(keys[6]), "bo": b(keys[7]),
    }


if __name__ == "__main__":
    B, N, C, H = 2, 8, 32, 4   # batch, seq, embed_dim, num_heads (head_dim = 8)

    key = jax.random.PRNGKey(0)
    kq, kk, kv, kp = jax.random.split(key, 4)
    q = jax.random.normal(kq, (B, N, C), jnp.float32)
    k = jax.random.normal(kk, (B, N, C), jnp.float32)
    v = jax.random.normal(kv, (B, N, C), jnp.float32)
    params = init_params(kp, C)

    # Unmasked path (dedicated kernel, zero mask DMA).
    out = jax.block_until_ready(
        multi_head_self_attention(q, k, v, params, num_heads=H))
    ref = _reference(q, k, v, params, num_heads=H)
    assert out.shape == (B, N, C)
    assert jnp.allclose(out, ref, atol=1e-2, rtol=1e-2), "unmasked mismatch"

    # Masked path (causal mask, raw 0/1 mask DMA'd, where/select in-kernel).
    mask = jnp.broadcast_to(jnp.tril(jnp.ones((N, N), jnp.int32)), (B, N, N))
    out_m = jax.block_until_ready(
        multi_head_self_attention(q, k, v, params, num_heads=H, mask=mask))
    ref_m = _reference(q, k, v, params, num_heads=H, mask=mask)
    assert jnp.allclose(out_m, ref_m, atol=1e-2, rtol=1e-2), "masked mismatch"

    print("KERNEL_OK")
</pallas_src>

<mosaic_0001>
module attributes {stable_mosaic.version = 11 : i64} {
  func.func @_mhsa_kernel(%arg0: i32, %arg1: memref<8x32xf32, #tpu.memory_space<vmem>>, %arg2: memref<8x32xf32, #tpu.memory_space<vmem>>, %arg3: memref<8x32xf32, #tpu.memory_space<vmem>>, %arg4: memref<4x32x32xf32, #tpu.memory_space<vmem>>, %arg5: memref<4x1x32xf32, #tpu.memory_space<vmem>>, %arg6: memref<8x32xf32, #tpu.memory_space<vmem>>) attributes {dimension_semantics = [#tpu.dimension_semantics<parallel>], iteration_bounds = array<i64: 2>, scalar_prefetch = 0 : i64, scratch_operands = 0 : i64, tpu.core_type = #tpu.core_type<tc>, window_params = [{transform_indices = @transform_0, window_bounds = array<i64: 8, 32>}, {transform_indices = @transform_1, window_bounds = array<i64: 8, 32>}, {transform_indices = @transform_2, window_bounds = array<i64: 8, 32>}, {pipeline_mode = #tpu.pipeline_mode<synchronous>, transform_indices = @transform_3, window_bounds = array<i64: 4, 32, 32>}, {pipeline_mode = #tpu.pipeline_mode<synchronous>, transform_indices = @transform_4, window_bounds = array<i64: 4, 1, 32>}, {transform_indices = @transform_5, window_bounds = array<i64: 8, 32>}]} {
    %c0 = arith.constant 0 : index
    %c0_0 = arith.constant 0 : index
    %0 = vector.load %arg1[%c0, %c0_0] : memref<8x32xf32, #tpu.memory_space<vmem>>, vector<8x32xf32>
    %c0_1 = arith.constant 0 : index
    %c0_2 = arith.constant 0 : index
    %1 = vector.load %arg2[%c0_1, %c0_2] : memref<8x32xf32, #tpu.memory_space<vmem>>, vector<8x32xf32>
    %c0_3 = arith.constant 0 : index
    %c0_4 = arith.constant 0 : index
    %2 = vector.load %arg3[%c0_3, %c0_4] : memref<8x32xf32, #tpu.memory_space<vmem>>, vector<8x32xf32>
    %c0_5 = arith.constant 0 : index
    %c0_6 = arith.constant 0 : index
    %c0_7 = arith.constant 0 : index
    %3 = vector.load %arg4[%c0_5, %c0_6, %c0_7] : memref<4x32x32xf32, #tpu.memory_space<vmem>>, vector<1x32x32xf32>
    %4 = vector.shape_cast %3 : vector<1x32x32xf32> to vector<32x32xf32>
    %cst = arith.constant dense<0.000000e+00> : vector<8x32xf32>
    %5 = tpu.matmul %0, %4, %cst {dimension_numbers = #tpu.dot_dimension_numbers<[1], [0], [0], [1], [0, 0, 1, 1], [], []>} : vector<8x32xf32>, vector<32x32xf32>, vector<8x32xf32> -> vector<8x32xf32>
    %c0_8 = arith.constant 0 : index
    %c0_9 = arith.constant 0 : index
    %c0_10 = arith.constant 0 : index
    %6 = vector.load %arg5[%c0_8, %c0_9, %c0_10] : memref<4x1x32xf32, #tpu.memory_space<vmem>>, vector<1x1x32xf32>
    %7 = vector.shape_cast %6 : vector<1x1x32xf32> to vector<1x32xf32>
    %8 = vector.broadcast %7 : vector<1x32xf32> to vector<8x32xf32>
    %9 = arith.addf %5, %8 : vector<8x32xf32>
    %c1 = arith.constant 1 : index
    %c0_11 = arith.constant 0 : index
    %c0_12 = arith.constant 0 : index
    %10 = vector.load %arg4[%c1, %c0_11, %c0_12] : memref<4x32x32xf32, #tpu.memory_space<vmem>>, vector<1x32x32xf32>
    %11 = vector.shape_cast %10 : vector<1x32x32xf32> to vector<32x32xf32>
    %cst_13 = arith.constant dense<0.000000e+00> : vector<8x32xf32>
    %12 = tpu.matmul %1, %11, %cst_13 {dimension_numbers = #tpu.dot_dimension_numbers<[1], [0], [0], [1], [0, 0, 1, 1], [], []>} : vector<8x32xf32>, vector<32x32xf32>, vector<8x32xf32> -> vector<8x32xf32>
    %c1_14 = arith.constant 1 : index
    %c0_15 = arith.constant 0 : index
    %c0_16 = arith.constant 0 : index
    %13 = vector.load %arg5[%c1_14, %c0_15, %c0_16] : memref<4x1x32xf32, #tpu.memory_space<vmem>>, vector<1x1x32xf32>
    %14 = vector.shape_cast %13 : vector<1x1x32xf32> to vector<1x32xf32>
    %15 = vector.broadcast %14 : vector<1x32xf32> to vector<8x32xf32>
    %16 = arith.addf %12, %15 : vector<8x32xf32>
    %c2 = arith.constant 2 : index
    %c0_17 = arith.constant 0 : index
    %c0_18 = arith.constant 0 : index
    %17 = vector.load %arg4[%c2, %c0_17, %c0_18] : memref<4x32x32xf32, #tpu.memory_space<vmem>>, vector<1x32x32xf32>
    %18 = vector.shape_cast %17 : vector<1x32x32xf32> to vector<32x32xf32>
    %cst_19 = arith.constant dense<0.000000e+00> : vector<8x32xf32>
    %19 = tpu.matmul %2, %18, %cst_19 {dimension_numbers = #tpu.dot_dimension_numbers<[1], [0], [0], [1], [0, 0, 1, 1], [], []>} : vector<8x32xf32>, vector<32x32xf32>, vector<8x32xf32> -> vector<8x32xf32>
    %c2_20 = arith.constant 2 : index
    %c0_21 = arith.constant 0 : index
    %c0_22 = arith.constant 0 : index
    %20 = vector.load %arg5[%c2_20, %c0_21, %c0_22] : memref<4x1x32xf32, #tpu.memory_space<vmem>>, vector<1x1x32xf32>
    %21 = vector.shape_cast %20 : vector<1x1x32xf32> to vector<1x32xf32>
    %22 = vector.broadcast %21 : vector<1x32xf32> to vector<8x32xf32>
    %23 = arith.addf %19, %22 : vector<8x32xf32>
    %24 = vector.extract_strided_slice %9 {offsets = [0, 0], sizes = [8, 8], strides = [1, 1]} : vector<8x32xf32> to vector<8x8xf32>
    %25 = vector.extract_strided_slice %9 {offsets = [0, 8], sizes = [8, 8], strides = [1, 1]} : vector<8x32xf32> to vector<8x8xf32>
    %26 = vector.extract_strided_slice %9 {offsets = [0, 16], sizes = [8, 8], strides = [1, 1]} : vector<8x32xf32> to vector<8x8xf32>
    %27 = vector.extract_strided_slice %9 {offsets = [0, 24], sizes = [8, 8], strides = [1, 1]} : vector<8x32xf32> to vector<8x8xf32>
    %28 = tpu.concatenate %24, %25, %26, %27 in 0 : vector<8x8xf32>, vector<8x8xf32>, vector<8x8xf32>, vector<8x8xf32> -> vector<32x8xf32>
    %29 = vector.shape_cast %28 : vector<32x8xf32> to vector<4x8x8xf32>
    %30 = vector.extract_strided_slice %16 {offsets = [0, 0], sizes = [8, 8], strides = [1, 1]} : vector<8x32xf32> to vector<8x8xf32>
    %31 = vector.extract_strided_slice %16 {offsets = [0, 8], sizes = [8, 8], strides = [1, 1]} : vector<8x32xf32> to vector<8x8xf32>
    %32 = vector.extract_strided_slice %16 {offsets = [0, 16], sizes = [8, 8], strides = [1, 1]} : vector<8x32xf32> to vector<8x8xf32>
    %33 = vector.extract_strided_slice %16 {offsets = [0, 24], sizes = [8, 8], strides = [1, 1]} : vector<8x32xf32> to vector<8x8xf32>
    %34 = tpu.concatenate %30, %31, %32, %33 in 0 : vector<8x8xf32>, vector<8x8xf32>, vector<8x8xf32>, vector<8x8xf32> -> vector<32x8xf32>
    %35 = vector.shape_cast %34 : vector<32x8xf32> to vector<4x8x8xf32>
    %36 = vector.extract_strided_slice %23 {offsets = [0, 0], sizes = [8, 8], strides = [1, 1]} : vector<8x32xf32> to vector<8x8xf32>
    %37 = vector.extract_strided_slice %23 {offsets = [0, 8], sizes = [8, 8], strides = [1, 1]} : vector<8x32xf32> to vector<8x8xf32>
    %38 = vector.extract_strided_slice %23 {offsets = [0, 16], sizes = [8, 8], strides = [1, 1]} : vector<8x32xf32> to vector<8x8xf32>
    %39 = vector.extract_strided_slice %23 {offsets = [0, 24], sizes = [8, 8], strides = [1, 1]} : vector<8x32xf32> to vector<8x8xf32>
    %40 = tpu.concatenate %36, %37, %38, %39 in 0 : vector<8x8xf32>, vector<8x8xf32>, vector<8x8xf32>, vector<8x8xf32> -> vector<32x8xf32>
    %41 = vector.shape_cast %40 : vector<32x8xf32> to vector<4x8x8xf32>
    "tpu.trace_start"() <{level = 10 : i32, message = "gnd,gmd->gnm"}> : () -> ()
    %cst_23 = arith.constant dense<0.000000e+00> : vector<4x8x8xf32>
    %42 = tpu.matmul %29, %35, %cst_23 {dimension_numbers = #tpu.dot_dimension_numbers<[2], [2], [1], [1], [0, 0, 0, 1, 1, 1], [0], [0]>} : vector<4x8x8xf32>, vector<4x8x8xf32>, vector<4x8x8xf32> -> vector<4x8x8xf32>
    "tpu.trace_stop"() : () -> ()
    %cst_24 = arith.constant dense<0xFF800000> : vector<4x8xf32>
    %43 = vector.multi_reduction <maximumf>, %42, %cst_24 [2] : vector<4x8x8xf32> to vector<4x8xf32>
    %44 = vector.shape_cast %43 : vector<4x8xf32> to vector<4x8x1xf32>
    %45 = vector.broadcast %44 : vector<4x8x1xf32> to vector<4x8x8xf32>
    %46 = arith.subf %42, %45 : vector<4x8x8xf32>
    %47 = math.exp %46 : vector<4x8x8xf32>
    %cst_25 = arith.constant dense<0.000000e+00> : vector<4x8xf32>
    %48 = vector.multi_reduction <add>, %47, %cst_25 [2] : vector<4x8x8xf32> to vector<4x8xf32>
    %49 = vector.shape_cast %48 : vector<4x8xf32> to vector<4x8x1xf32>
    %50 = vector.broadcast %49 : vector<4x8x1xf32> to vector<4x8x8xf32>
    %51 = arith.divf %47, %50 : vector<4x8x8xf32>
    "tpu.trace_start"() <{level = 10 : i32, message = "gnm,gmd->gnd"}> : () -> ()
    %cst_26 = arith.constant dense<0.000000e+00> : vector<4x8x8xf32>
    %52 = tpu.matmul %51, %41, %cst_26 {dimension_numbers = #tpu.dot_dimension_numbers<[2], [1], [1], [2], [0, 0, 0, 1, 1, 2], [0], [0]>} : vector<4x8x8xf32>, vector<4x8x8xf32>, vector<4x8x8xf32> -> vector<4x8x8xf32>
    "tpu.trace_stop"() : () -> ()
    %53 = vector.extract_strided_slice %52 {offsets = [0, 0, 0], sizes = [1, 8, 8], strides = [1, 1, 1]} : vector<4x8x8xf32> to vector<1x8x8xf32>
    %54 = vector.shape_cast %53 : vector<1x8x8xf32> to vector<8x8xf32>
    %55 = vector.extract_strided_slice %52 {offsets = [1, 0, 0], sizes = [1, 8, 8], strides = [1, 1, 1]} : vector<4x8x8xf32> to vector<1x8x8xf32>
    %56 = vector.shape_cast %55 : vector<1x8x8xf32> to vector<8x8xf32>
    %57 = vector.extract_strided_slice %52 {offsets = [2, 0, 0], sizes = [1, 8, 8], strides = [1, 1, 1]} : vector<4x8x8xf32> to vector<1x8x8xf32>
    %58 = vector.shape_cast %57 : vector<1x8x8xf32> to vector<8x8xf32>
    %59 = vector.extract_strided_slice %52 {offsets = [3, 0, 0], sizes = [1, 8, 8], strides = [1, 1, 1]} : vector<4x8x8xf32> to vector<1x8x8xf32>
    %60 = vector.shape_cast %59 : vector<1x8x8xf32> to vector<8x8xf32>
    %61 = tpu.concatenate %54, %56, %58, %60 in 1 : vector<8x8xf32>, vector<8x8xf32>, vector<8x8xf32>, vector<8x8xf32> -> vector<8x32xf32>
    %c3 = arith.constant 3 : index
    %c0_27 = arith.constant 0 : index
    %c0_28 = arith.constant 0 : index
    %62 = vector.load %arg4[%c3, %c0_27, %c0_28] : memref<4x32x32xf32, #tpu.memory_space<vmem>>, vector<1x32x32xf32>
    %63 = vector.shape_cast %62 : vector<1x32x32xf32> to vector<32x32xf32>
    %cst_29 = arith.constant dense<0.000000e+00> : vector<8x32xf32>
    %64 = tpu.matmul %61, %63, %cst_29 {dimension_numbers = #tpu.dot_dimension_numbers<[1], [0], [0], [1], [0, 0, 1, 1], [], []>} : vector<8x32xf32>, vector<32x32xf32>, vector<8x32xf32> -> vector<8x32xf32>
    %c3_30 = arith.constant 3 : index
    %c0_31 = arith.constant 0 : index
    %c0_32 = arith.constant 0 : index
    %65 = vector.load %arg5[%c3_30, %c0_31, %c0_32] : memref<4x1x32xf32, #tpu.memory_space<vmem>>, vector<1x1x32xf32>
    %66 = vector.shape_cast %65 : vector<1x1x32xf32> to vector<1x32xf32>
    %67 = vector.broadcast %66 : vector<1x32xf32> to vector<8x32xf32>
    %68 = arith.addf %64, %67 : vector<8x32xf32>
    %c0_33 = arith.constant 0 : index
    %c0_34 = arith.constant 0 : index
    %69 = vector.load %arg6[%c0_33, %c0_34] : memref<8x32xf32, #tpu.memory_space<vmem>>, vector<8x32xf32>
    tpu.vector_store %arg6[%c0_33, %c0_34], %68 {strides = array<i32>} : memref<8x32xf32, #tpu.memory_space<vmem>>, vector<8x32xf32>,
    return
  }
  func.func @transform_0(%arg0: i32) -> (i32, i32) {
    %c0_i32 = arith.constant 0 : i32
    %c0_i32_0 = arith.constant 0 : i32
    return %arg0, %c0_i32 : i32, i32
  }
  func.func @transform_1(%arg0: i32) -> (i32, i32) {
    %c0_i32 = arith.constant 0 : i32
    %c0_i32_0 = arith.constant 0 : i32
    return %arg0, %c0_i32 : i32, i32
  }
  func.func @transform_2(%arg0: i32) -> (i32, i32) {
    %c0_i32 = arith.constant 0 : i32
    %c0_i32_0 = arith.constant 0 : i32
    return %arg0, %c0_i32 : i32, i32
  }
  func.func @transform_3(%arg0: i32) -> (i32, i32, i32) {
    %c0_i32 = arith.constant 0 : i32
    %c0_i32_0 = arith.constant 0 : i32
    %c0_i32_1 = arith.constant 0 : i32
    %c0_i32_2 = arith.constant 0 : i32
    return %c0_i32, %c0_i32_0, %c0_i32_1 : i32, i32, i32
  }
  func.func @transform_4(%arg0: i32) -> (i32, i32, i32) {
    %c0_i32 = arith.constant 0 : i32
    %c0_i32_0 = arith.constant 0 : i32
    %c0_i32_1 = arith.constant 0 : i32
    %c0_i32_2 = arith.constant 0 : i32
    return %c0_i32, %c0_i32_0, %c0_i32_1 : i32, i32, i32
  }
  func.func @transform_5(%arg0: i32) -> (i32, i32) {
    %c0_i32 = arith.constant 0 : i32
    %c0_i32_0 = arith.constant 0 : i32
    return %arg0, %c0_i32 : i32, i32
  }
}

</mosaic_0001>

<llo_original>
// kernel: tpu_custom_call.1
$region0: #{tpu_custom_call.1}
  #allocation0 [shape = 'u32[]', space=smem, size = 0x4, offset = 0x4, fixed_abs, tag = 'smem constant byte address 0x4 - core index']
  #allocation1 [shape = 'u32[144,128]{1,0:T(1,128)}', space=vmem, size = 0x12000, scoped, tag = 'internal scratch']
  %s0 = inlined_call_operand.hbm [shape: f32[16,32], index: 0, kind: input, shape index: {}]
  %s1 = inlined_call_operand.hbm [shape: f32[16,32], index: 1, kind: input, shape index: {}]
  %s2 = inlined_call_operand.hbm [shape: f32[16,32], index: 2, kind: input, shape index: {}]
  %s3 = inlined_call_operand.hbm [shape: f32[4,32,32], index: 3, kind: input, shape index: {}]
  %s4 = inlined_call_operand.vmem [shape: f32[4,1,32], index: 4, kind: input, shape index: {}]
  %s5 = inlined_call_operand.hbm [shape: f32[16,32], index: 5, kind: output, shape index: {}]
  %s6 = sld [smem:[#allocation0]]
  $region69: #{tpu_custom_call.1} parent=0
    _
  %s8 = ssub.s32 1, %s6
  %s9 = scalar_select 0, %s8, %s6
  $region1: #{tpu_custom_call.1} parent=0
    #allocation2 [shape = 'u8[8192]{0}', space=vmem, size = 0x2000, scoped, tag = 'input window, operand 0']
    #allocation3 [shape = 's32[2]{0}', space=sflag, size = 0x8, scoped, tag = 'scoped memory for tpu_custom_call.1']
    #allocation4 [shape = 's32[2]{0}', space=sflag, size = 0x8, scoped, tag = 'scoped memory for tpu_custom_call.1']
    #allocation5 [shape = 'u8[8192]{0}', space=vmem, size = 0x2000, scoped, tag = 'input window, operand 1']
    #allocation6 [shape = 's32[2]{0}', space=sflag, size = 0x8, scoped, tag = 'scoped memory for tpu_custom_call.1']
    #allocation7 [shape = 'u8[8192]{0}', space=vmem, size = 0x2000, scoped, tag = 'input window, operand 2']
    #allocation8 [shape = 'u8[65536]{0}', space=vmem, size = 0x10000, scoped, tag = 'input window, operand 3, single buffered']
    #allocation9 [shape = 's32[1]{0}', space=sflag, size = 0x4, scoped, tag = 'scoped memory for tpu_custom_call.1']
    #allocation10 [shape = 'u8[8192]{0}', space=vmem, size = 0x2000, scoped, tag = 'output window, operand 0']
    %10 = vsyncpa [#allocation3], 0
    %s11 = scalar_lea.sflag [#allocation3], 1
    %12 = vsyncpa %s11, 0
    %13 = vsyncpa [#allocation6], 0
    %s14 = scalar_lea.sflag [#allocation6], 1
    %15 = vsyncpa %s14, 0
    %16 = vsyncpa [#allocation9], 0
    %17 = vsyncpa [#allocation4], 0
    %s18 = scalar_lea.sflag [#allocation4], 1
    %19 = vsyncpa %s18, 0
    loop: start=0, step=1, limit=4
    $region2: #{tpu_custom_call.1} parent=1 // loop_pre_header
      _
    $region3: #{tpu_custom_call.1} parent=1 // loop_header
      %s21 = sphi 0, %s25
      %p22 = scmp.ge.s32.totalorder %s21, 4
      %s31 = sphi 0, %s33
      %s34 = sphi 0, %s31
      %s35 = sphi 0, %s34
      %s51 = sphi 0, %s35
      %s57 = sphi 0, %s59
      %s60 = sphi 0, %s57
      %s61 = sphi 0, %s60
      %s77 = sphi 0, %s61
      %s83 = sphi 0, %s85
      %s86 = sphi 0, %s83
      %s87 = sphi 0, %s86
      %s103 = sphi 0, %s87
      %s107 = sphi 0, %s107
      %s109 = sphi 0, %s107
      %s110 = sphi 0, %s109
      %s124 = sphi 0, %s110
      %s128 = sphi 0, %s128
      %s130 = sphi 0, %s128
      %s131 = sphi 0, %s130
      %s145 = sphi 0, %s131
      %s151 = sphi 0, %s153
      %s154 = sphi 0, %s151
      %s155 = sphi 0, %s154
      %s171 = sphi 0, %s155
    $region4: #{tpu_custom_call.1} parent=1 // loop_header_branch
      %24 = sbr.rel (%p22) target = $region8
    $region5: #{tpu_custom_call.1} parent=1 // loop_body
      %s26 = ssub.s32 %s21, 1
      %s27 = ssub.s32 %s21, 2
      %s28 = sadd.s32 %s21, 1
      %s29 = ssub.s32 %s21, %s28
      %p30 = scmp.eq.s32.totalorder %s29, 0
      %s32 = sadd.s32 %s31, 1
      %s33 = scalar_select %p30, %s31, %s32
      %p36 = pneg %p30
      %p37 = scmp.eq.s32.totalorder %s21, 1
      %p38 = por %p36, %p37
      %p39 = scmp.ne.s32.totalorder %s31, %s34
      %p40 = scmp.eq.s32.totalorder %s21, 0
      %p41 = por %p39, %p40
      %p42 = scmp.ne.s32.totalorder %s31, %s34
      %p43 = scmp.eq.s32.totalorder %s26, 1
      %p44 = por %p42, %p43
      %p45 = scmp.ne.s32.totalorder %s34, %s35
      %p46 = scmp.eq.s32.totalorder %s26, 0
      %p47 = por %p45, %p46
      %p48 = scmp.ne.s32.totalorder %s34, %s35
      %p49 = scmp.eq.s32.totalorder %s27, 1
      %p50 = por %p48, %p49
      %p52 = scmp.ne.s32.totalorder %s35, %s51
      %p53 = scmp.eq.s32.totalorder %s27, 0
      %p54 = por %p52, %p53
      %s55 = ssub.s32 %s21, %s28
      %p56 = scmp.eq.s32.totalorder %s55, 0
      %s58 = sadd.s32 %s57, 1
      %s59 = scalar_select %p56, %s57, %s58
      %p62 = pneg %p56
      %p63 = scmp.eq.s32.totalorder %s21, 1
      %p64 = por %p62, %p63
      %p65 = scmp.ne.s32.totalorder %s57, %s60
      %p66 = scmp.eq.s32.totalorder %s21, 0
      %p67 = por %p65, %p66
      %p68 = scmp.ne.s32.totalorder %s57, %s60
      %p69 = scmp.eq.s32.totalorder %s26, 1
      %p70 = por %p68, %p69
      %p71 = scmp.ne.s32.totalorder %s60, %s61
      %p72 = scmp.eq.s32.totalorder %s26, 0
      %p73 = por %p71, %p72
      %p74 = scmp.ne.s32.totalorder %s60, %s61
      %p75 = scmp.eq.s32.totalorder %s27, 1
      %p76 = por %p74, %p75
      %p78 = scmp.ne.s32.totalorder %s61, %s77
      %p79 = scmp.eq.s32.totalorder %s27, 0
      %p80 = por %p78, %p79
      %s81 = ssub.s32 %s21, %s28
      %p82 = scmp.eq.s32.totalorder %s81, 0
      %s84 = sadd.s32 %s83, 1
      %s85 = scalar_select %p82, %s83, %s84
      %p88 = pneg %p82
      %p89 = scmp.eq.s32.totalorder %s21, 1
      %p90 = por %p88, %p89
      %p91 = scmp.ne.s32.totalorder %s83, %s86
      %p92 = scmp.eq.s32.totalorder %s21, 0
      %p93 = por %p91, %p92
      %p94 = scmp.ne.s32.totalorder %s83, %s86
      %p95 = scmp.eq.s32.totalorder %s26, 1
      %p96 = por %p94, %p95
      %p97 = scmp.ne.s32.totalorder %s86, %s87
      %p98 = scmp.eq.s32.totalorder %s26, 0
      %p99 = por %p97, %p98
      %p100 = scmp.ne.s32.totalorder %s86, %s87
      %p101 = scmp.eq.s32.totalorder %s27, 1
      %p102 = por %p100, %p101
      %p104 = scmp.ne.s32.totalorder %s87, %s103
      %p105 = scmp.eq.s32.totalorder %s27, 0
      %p106 = por %p104, %p105
      %s108 = sadd.s32 %s107, 1
      %p111 = scmp.eq.s32.totalorder %s21, 1
      %p112 = scmp.ne.s32.totalorder %s107, %s109
      %p113 = scmp.eq.s32.totalorder %s21, 0
      %p114 = por %p112, %p113
      %p115 = scmp.ne.s32.totalorder %s107, %s109
      %p116 = scmp.eq.s32.totalorder %s26, 1
      %p117 = por %p115, %p116
      %p118 = scmp.ne.s32.totalorder %s109, %s110
      %p119 = scmp.eq.s32.totalorder %s26, 0
      %p120 = por %p118, %p119
      %p121 = scmp.ne.s32.totalorder %s109, %s110
      %p122 = scmp.eq.s32.totalorder %s27, 1
      %p123 = por %p121, %p122
      %p125 = scmp.ne.s32.totalorder %s110, %s124
      %p126 = scmp.eq.s32.totalorder %s27, 0
      %p127 = por %p125, %p126
      %s129 = sadd.s32 %s128, 1
      %p132 = scmp.eq.s32.totalorder %s21, 1
      %p133 = scmp.ne.s32.totalorder %s128, %s130
      %p134 = scmp.eq.s32.totalorder %s21, 0
      %p135 = por %p133, %p134
      %p136 = scmp.ne.s32.totalorder %s128, %s130
      %p137 = scmp.eq.s32.totalorder %s26, 1
      %p138 = por %p136, %p137
      %p139 = scmp.ne.s32.totalorder %s130, %s131
      %p140 = scmp.eq.s32.totalorder %s26, 0
      %p141 = por %p139, %p140
      %p142 = scmp.ne.s32.totalorder %s130, %s131
      %p143 = scmp.eq.s32.totalorder %s27, 1
      %p144 = por %p142, %p143
      %p146 = scmp.ne.s32.totalorder %s131, %s145
      %p147 = scmp.eq.s32.totalorder %s27, 0
      %p148 = por %p146, %p147
      %s149 = ssub.s32 %s21, %s28
      %p150 = scmp.eq.s32.totalorder %s149, 0
      %s152 = sadd.s32 %s151, 1
      %s153 = scalar_select %p150, %s151, %s152
      %p156 = pneg %p150
      %p157 = scmp.eq.s32.totalorder %s21, 1
      %p158 = por %p156, %p157
      %p159 = scmp.ne.s32.totalorder %s151, %s154
      %p160 = scmp.eq.s32.totalorder %s21, 0
      %p161 = por %p159, %p160
      %p162 = scmp.ne.s32.totalorder %s151, %s154
      %p163 = scmp.eq.s32.totalorder %s26, 1
      %p164 = por %p162, %p163
      %p165 = scmp.ne.s32.totalorder %s154, %s155
      %p166 = scmp.eq.s32.totalorder %s26, 0
      %p167 = por %p165, %p166
      %p168 = scmp.ne.s32.totalorder %s154, %s155
      %p169 = scmp.eq.s32.totalorder %s27, 1
      %p170 = por %p168, %p169
      %p172 = scmp.ne.s32.totalorder %s155, %s171
      %p173 = scmp.eq.s32.totalorder %s27, 0
      %p174 = por %p172, %p173
      %p175 = scmp.le.s32.totalorder 1, %s21
      %p176 = scmp.lt.s32.totalorder %s21, 3
      %p177 = pnand %p175, %p176
      %p178 = pneg %p177
      // Predicated region
      $region9: #{tpu_custom_call.1} parent=5 // pred_check
        _
      $region10: #{tpu_custom_call.1} parent=5 // pred_check_branch
        %180 = sbr.rel (%p177) target = $region12
      $region11: #{tpu_custom_call.1} parent=5 // pred_region
        %s181 = ssub.s32 %s21, 1
        // Predicated region
        $region13: #{tpu_custom_call.1} parent=11 // pred_check
          %p182 = pneg %p120
        $region14: #{tpu_custom_call.1} parent=11 // pred_check_branch
          %184 = sbr.rel (%p182) target = $region16
        $region15: #{tpu_custom_call.1} parent=11 // pred_region
          %s186 = ssub.s32 2048, 2048
          %187 = vsyncadd [#allocation9], %s186
          %s188 = sshll.u32 [#allocation8], 4
          %s189 = int_to_ptr.vmem [resolvable:$true] %s188
          %194 = dma.hbm_to_vmem [thread:$0]  %s3, 2048, %s189, [#allocation9], 128, 128, 8
        $region16: #{tpu_custom_call.1} parent=11 // pred_fallthru
          _
        // Predicated region
        $region17: #{tpu_custom_call.1} parent=11 // pred_check
          %p195 = pneg %p141
        $region18: #{tpu_custom_call.1} parent=11 // pred_check_branch
          %197 = sbr.rel (%p195) target = $region20
        $region19: #{tpu_custom_call.1} parent=11 // pred_region
          _
        $region20: #{tpu_custom_call.1} parent=11 // pred_fallthru
          _
      $region12: #{tpu_custom_call.1} parent=5 // pred_fallthru
        _
      %p198 = scmp.lt.s32.totalorder %s21, 2
      // Predicated region
      $region21: #{tpu_custom_call.1} parent=5 // pred_check
        %p199 = pneg %p198
      $region22: #{tpu_custom_call.1} parent=5 // pred_check_branch
        %201 = sbr.rel (%p199) target = $region24
      $region23: #{tpu_custom_call.1} parent=5 // pred_region
        // Predicated region
        $region25: #{tpu_custom_call.1} parent=23 // pred_check
          %p202 = pneg %p41
        $region26: #{tpu_custom_call.1} parent=23 // pred_check_branch
          %204 = sbr.rel (%p202) target = $region28
        $region27: #{tpu_custom_call.1} parent=23 // pred_region
          %s205 = sand.u32 %s31, 1
          %s206 = scalar_lea.sflag [#allocation3], %s205
          %s207 = sand.u32 %s31, 1
          %s208 = smul.addr %s207, 8
          %s209 = scalar_lea.vmem [#allocation2], %s208
          %s211 = ssub.s32 128, 128
          %212 = vsyncadd %s206, %s211
          %s213 = smul.addr %s21, 128
          %s214 = scalar_lea.hbm %s0, %s213
          %s216 = sshll.u32 %s209, 4
          %s217 = int_to_ptr.vmem [resolvable:$true] %s216
          %219 = dma.hbm_to_vmem [thread:$0]  %s214, 128, %s217, %s206
        $region28: #{tpu_custom_call.1} parent=23 // pred_fallthru
          _
        // Predicated region
        $region29: #{tpu_custom_call.1} parent=23 // pred_check
          %p220 = pneg %p67
        $region30: #{tpu_custom_call.1} parent=23 // pred_check_branch
          %222 = sbr.rel (%p220) target = $region32
        $region31: #{tpu_custom_call.1} parent=23 // pred_region
          %s223 = sand.u32 %s21, 1
          %s224 = scalar_lea.sflag [#allocation6], %s223
          %s225 = sand.u32 %s57, 1
          %s226 = smul.addr %s225, 8
          %s227 = scalar_lea.vmem [#allocation5], %s226
          %s229 = ssub.s32 128, 128
          %230 = vsyncadd %s224, %s229
          %s231 = smul.addr %s21, 128
          %s232 = scalar_lea.hbm %s1, %s231
          %s234 = sshll.u32 %s227, 4
          %s235 = int_to_ptr.vmem [resolvable:$true] %s234
          %237 = dma.hbm_to_vmem [thread:$0]  %s232, 128, %s235, %s224
        $region32: #{tpu_custom_call.1} parent=23 // pred_fallthru
          _
        // Predicated region
        $region33: #{tpu_custom_call.1} parent=23 // pred_check
          %p238 = pneg %p93
        $region34: #{tpu_custom_call.1} parent=23 // pred_check_branch
          %240 = sbr.rel (%p238) target = $region36
        $region35: #{tpu_custom_call.1} parent=23 // pred_region
          %s241 = sand.u32 %s21, 1
          %s242 = scalar_lea.sflag [#allocation6], %s241
          %s243 = sand.u32 %s83, 1
          %s244 = smul.addr %s243, 8
          %s245 = scalar_lea.vmem [#allocation7], %s244
          %s247 = ssub.s32 128, 128
          %248 = vsyncadd %s242, %s247
          %s249 = smul.addr %s21, 128
          %s250 = scalar_lea.hbm %s2, %s249
          %s252 = sshll.u32 %s245, 4
          %s253 = int_to_ptr.vmem [resolvable:$true] %s252
          %255 = dma.hbm_to_vmem [thread:$0]  %s250, 128, %s253, %s242
        $region36: #{tpu_custom_call.1} parent=23 // pred_fallthru
          _
      $region24: #{tpu_custom_call.1} parent=5 // pred_fallthru
        _
      %p256 = scmp.le.s32.totalorder 1, %s21
      %p257 = scmp.lt.s32.totalorder %s21, 3
      %p258 = pnand %p256, %p257
      %p259 = pneg %p258
      // Predicated region
      $region37: #{tpu_custom_call.1} parent=5 // pred_check
        _
      $region38: #{tpu_custom_call.1} parent=5 // pred_check_branch
        %261 = sbr.rel (%p258) target = $region40
      $region39: #{tpu_custom_call.1} parent=5 // pred_region
        %s262 = ssub.s32 %s21, 1
        %s263 = sand.u32 %s34, 1
        %s264 = scalar_lea.sflag [#allocation3], %s263
        %s265 = sand.u32 %s34, 1
        %s266 = smul.addr %s265, 8
        %s267 = scalar_lea.vmem [#allocation2], %s266
        // Predicated region
        $region41: #{tpu_custom_call.1} parent=39 // pred_check
          %p268 = pneg %p47
        $region42: #{tpu_custom_call.1} parent=39 // pred_check_branch
          %270 = sbr.rel (%p268) target = $region44
        $region43: #{tpu_custom_call.1} parent=39 // pred_region
          %271 = dma.done %s264, 128
        $region44: #{tpu_custom_call.1} parent=39 // pred_fallthru
          _
        %s272 = sand.u32 %s26, 1
        %s273 = scalar_lea.sflag [#allocation6], %s272
        %s274 = sand.u32 %s60, 1
        %s275 = smul.addr %s274, 8
        %s276 = scalar_lea.vmem [#allocation5], %s275
        // Predicated region
        $region45: #{tpu_custom_call.1} parent=39 // pred_check
          %p277 = pneg %p73
        $region46: #{tpu_custom_call.1} parent=39 // pred_check_branch
          %279 = sbr.rel (%p277) target = $region48
        $region47: #{tpu_custom_call.1} parent=39 // pred_region
          %280 = dma.done %s273, 128
        $region48: #{tpu_custom_call.1} parent=39 // pred_fallthru
          _
        %s281 = sand.u32 %s26, 1
        %s282 = scalar_lea.sflag [#allocation6], %s281
        %s283 = sand.u32 %s86, 1
        %s284 = smul.addr %s283, 8
        %s285 = scalar_lea.vmem [#allocation7], %s284
        // Predicated region
        $region49: #{tpu_custom_call.1} parent=39 // pred_check
          %p286 = pneg %p99
        $region50: #{tpu_custom_call.1} parent=39 // pred_check_branch
          %288 = sbr.rel (%p286) target = $region52
        $region51: #{tpu_custom_call.1} parent=39 // pred_region
          %289 = dma.done %s282, 128
        $region52: #{tpu_custom_call.1} parent=39 // pred_fallthru
          _
        // Predicated region
        $region53: #{tpu_custom_call.1} parent=39 // pred_check
          %p290 = pneg %p120
        $region54: #{tpu_custom_call.1} parent=39 // pred_check_branch
          %292 = sbr.rel (%p290) target = $region56
        $region55: #{tpu_custom_call.1} parent=39 // pred_region
          %293 = dma.done [#allocation9], 2048
        $region56: #{tpu_custom_call.1} parent=39 // pred_fallthru
          _
        %s294 = sand.u32 %s34, 1
        %s295 = scalar_lea.sflag [#allocation3], %s294
        %s296 = sand.u32 %s34, 1
        %s297 = smul.addr %s296, 8
        %s298 = scalar_lea.vmem [#allocation2], %s297
        %p299 = pneg %p47
        %p300 = pneg %p44
        %s301 = sand.u32 %s26, 1
        %s302 = scalar_lea.sflag [#allocation6], %s301
        %s303 = sand.u32 %s60, 1
        %s304 = smul.addr %s303, 8
        %s305 = scalar_lea.vmem [#allocation5], %s304
        %p306 = pneg %p73
        %p307 = pneg %p70
        %s308 = sand.u32 %s26, 1
        %s309 = scalar_lea.sflag [#allocation6], %s308
        %s310 = sand.u32 %s86, 1
        %s311 = smul.addr %s310, 8
        %s312 = scalar_lea.vmem [#allocation7], %s311
        %p313 = pneg %p99
        %p314 = pneg %p96
        %p315 = pneg %p120
        %p316 = pneg %p117
        %p317 = pneg %p141
        %p318 = pneg %p138
        %p319 = pneg %p167
        %p320 = pneg %p164
        %s321 = sand.u32 %s154, 1
        %s322 = scalar_lea.sflag [#allocation4], %s321
        %s323 = sand.u32 %s154, 1
        %s324 = smul.addr %s323, 8
        %s325 = scalar_lea.vmem [#allocation10], %s324
        %v326 = vld [vmem:[%s267] sm:$0xff]
        %v327 = vld [vmem:[%s276] sm:$0xff]
        %v328 = vld [vmem:[%s285] sm:$0xff]
        %v329 = vld [vmem:[#allocation8] sm:$0xff]
        %v330 = vld [vmem:[#allocation8 + $0x8] sm:$0xff]
        %v331 = vld [vmem:[#allocation8 + $0x10] sm:$0xff]
        %v332 = vld [vmem:[#allocation8 + $0x18] sm:$0xff]
        %v333 = vld [vmem:[%s4] sm:$0x1]
        %v335 = vlaneseq
        %v336 = vshrl.u32 %v335, 7
        %v337 = vsub.s32 0, %v336
        %v338 = vrot.slane %v333, %v337
        %vm340 = vcmask 261120
        %v342 = vsel %vm340, %v326, 0
        %344 = vmatprep.subr.mxu0 0.0
        %345 = vmatpush1.msra.mxu0 %v329
        %346 = vmatprep.subr.mxu0 0.0
        %347 = vmatpush1.msra.mxu0 %v330
        %348 = vmatprep.subr.mxu0 0.0
        %349 = vmatpush1.msra.mxu0 %v331
        %350 = vmatprep.subr.mxu0 0.0
        %351 = vmatpush1.msra.mxu0 %v332
        %352 = vmatprep.subr.mxu0 0.0
        %353 = vmatpush1.msra.mxu0 0.0
        %354 = vmatprep.subr.mxu0 0.0
        %355 = vmatpush1.msra.mxu0 0.0
        %356 = vmatprep.subr.mxu0 0.0
        %357 = vmatpush1.msra.mxu0 0.0
        %358 = vmatprep.subr.mxu0 0.0
        %359 = vmatpush1.msra.mxu0 0.0
        %360 = vmatprep.subr.mxu0 0.0
        %361 = vmatpush1.msra.mxu0 0.0
        %362 = vmatprep.subr.mxu0 0.0
        %363 = vmatpush1.msra.mxu0 0.0
        %364 = vmatprep.subr.mxu0 0.0
        %365 = vmatpush1.msra.mxu0 0.0
        %366 = vmatprep.subr.mxu0 0.0
        %367 = vmatpush1.msra.mxu0 0.0
        %368 = vmatprep.subr.mxu0 0.0
        %369 = vmatpush1.msra.mxu0 0.0
        %370 = vmatprep.subr.mxu0 0.0
        %371 = vmatpush1.msra.mxu0 0.0
        %372 = vmatprep.subr.mxu0 0.0
        %373 = vmatpush1.msra.mxu0 0.0
        %374 = vmatprep.subr.mxu0 0.0
        %375 = vmatpush1.msra.mxu0 0.0
        %376 = vmatprep.subr.mxu0 0.0
        %377 = vmatpush1.msra.mxu0 0.0
        %378 = vmatprep.subr.mxu0 0.0
        %379 = vmatpush1.msra.mxu0 0.0
        %380 = vmatprep.subr.mxu0 0.0
        %381 = vmatpush1.msra.mxu0 0.0
        %382 = vmatprep.subr.mxu0 0.0
        %383 = vmatpush1.msra.mxu0 0.0
        %384 = vmatprep.subr.mxu0 0.0
        %385 = vmatpush1.msra.mxu0 0.0
        %386 = vmatprep.subr.mxu0 0.0
        %387 = vmatpush1.msra.mxu0 0.0
        %388 = vmatprep.subr.mxu0 0.0
        %389 = vmatpush1.msra.mxu0 0.0
        %390 = vmatprep.subr.mxu0 0.0
        %391 = vmatpush1.msra.mxu0 0.0
        %392 = vmatprep.subr.mxu0 0.0
        %393 = vmatpush1.msra.mxu0 0.0
        %394 = vmatprep.subr.mxu0 0.0
        %395 = vmatpush1.msra.mxu0 0.0
        %396 = vmatprep.subr.mxu0 0.0
        %397 = vmatpush1.msra.mxu0 0.0
        %398 = vmatprep.subr.mxu0 0.0
        %399 = vmatpush1.msra.mxu0 0.0
        %400 = vmatprep.subr.mxu0 0.0
        %401 = vmatpush1.msra.mxu0 0.0
        %402 = vmatprep.subr.mxu0 0.0
        %403 = vmatpush1.msra.mxu0 0.0
        %404 = vmatprep.subr.mxu0 0.0
        %405 = vmatpush1.msra.mxu0 0.0
        %406 = vmatprep.subr.mxu0 0.0
        %407 = vmatpush1.msra.mxu0 0.0
        %408 = vmatprep.mubr.f32.mxu0 0.0
        %409 = vmatmul.mubr.f32.gmra.mrb[0].mxu0 %v342
        %v410 = vpop.f32.mrb[0].mxu0
        %v411 = vadd.f32 %v338, %v410
        %v412 = vpop.f32.mrb[0].mxu0
        %413 = vdwg.mxu0
        %s414 = scalar_lea.vmem [#allocation8], 32
        %v415 = vld [vmem:[%s414] sm:$0xff]
        %v416 = vld [vmem:[%s414 + $0x8] sm:$0xff]
        %v417 = vld [vmem:[%s414 + $0x10] sm:$0xff]
        %v418 = vld [vmem:[%s414 + $0x18] sm:$0xff]
        %s419 = scalar_lea.vmem %s4, 1
        %v420 = vld [vmem:[%s419] sm:$0x1]
        %v422 = vlaneseq
        %v423 = vshrl.u32 %v422, 7
        %v424 = vsub.s32 0, %v423
        %v425 = vrot.slane %v420, %v424
        %v428 = vsel %vm340, %v327, 0
        %430 = vmatprep.subr.mxu0 0.0
        %431 = vmatpush1.msra.mxu0 %v415
        %432 = vmatprep.subr.mxu0 0.0
        %433 = vmatpush1.msra.mxu0 %v416
        %434 = vmatprep.subr.mxu0 0.0
        %435 = vmatpush1.msra.mxu0 %v417
        %436 = vmatprep.subr.mxu0 0.0
        %437 = vmatpush1.msra.mxu0 %v418
        %438 = vmatprep.subr.mxu0 0.0
        %439 = vmatpush1.msra.mxu0 0.0
        %440 = vmatprep.subr.mxu0 0.0
        %441 = vmatpush1.msra.mxu0 0.0
        %442 = vmatprep.subr.mxu0 0.0
        %443 = vmatpush1.msra.mxu0 0.0
        %444 = vmatprep.subr.mxu0 0.0
        %445 = vmatpush1.msra.mxu0 0.0
        %446 = vmatprep.subr.mxu0 0.0
        %447 = vmatpush1.msra.mxu0 0.0
        %448 = vmatprep.subr.mxu0 0.0
        %449 = vmatpush1.msra.mxu0 0.0
        %450 = vmatprep.subr.mxu0 0.0
        %451 = vmatpush1.msra.mxu0 0.0
        %452 = vmatprep.subr.mxu0 0.0
        %453 = vmatpush1.msra.mxu0 0.0
        %454 = vmatprep.subr.mxu0 0.0
        %455 = vmatpush1.msra.mxu0 0.0
        %456 = vmatprep.subr.mxu0 0.0
        %457 = vmatpush1.msra.mxu0 0.0
        %458 = vmatprep.subr.mxu0 0.0
        %459 = vmatpush1.msra.mxu0 0.0
        %460 = vmatprep.subr.mxu0 0.0
        %461 = vmatpush1.msra.mxu0 0.0
        %462 = vmatprep.subr.mxu0 0.0
        %463 = vmatpush1.msra.mxu0 0.0
        %464 = vmatprep.subr.mxu0 0.0
        %465 = vmatpush1.msra.mxu0 0.0
        %466 = vmatprep.subr.mxu0 0.0
        %467 = vmatpush1.msra.mxu0 0.0
        %468 = vmatprep.subr.mxu0 0.0
        %469 = vmatpush1.msra.mxu0 0.0
        %470 = vmatprep.subr.mxu0 0.0
        %471 = vmatpush1.msra.mxu0 0.0
        %472 = vmatprep.subr.mxu0 0.0
        %473 = vmatpush1.msra.mxu0 0.0
        %474 = vmatprep.subr.mxu0 0.0
        %475 = vmatpush1.msra.mxu0 0.0
        %476 = vmatprep.subr.mxu0 0.0
        %477 = vmatpush1.msra.mxu0 0.0
        %478 = vmatprep.subr.mxu0 0.0
        %479 = vmatpush1.msra.mxu0 0.0
        %480 = vmatprep.subr.mxu0 0.0
        %481 = vmatpush1.msra.mxu0 0.0
        %482 = vmatprep.subr.mxu0 0.0
        %483 = vmatpush1.msra.mxu0 0.0
        %484 = vmatprep.subr.mxu0 0.0
        %485 = vmatpush1.msra.mxu0 0.0
        %486 = vmatprep.subr.mxu0 0.0
        %487 = vmatpush1.msra.mxu0 0.0
        %488 = vmatprep.subr.mxu0 0.0
        %489 = vmatpush1.msra.mxu0 0.0
        %490 = vmatprep.subr.mxu0 0.0
        %491 = vmatpush1.msra.mxu0 0.0
        %492 = vmatprep.subr.mxu0 0.0
        %493 = vmatpush1.msra.mxu0 0.0
        %494 = vmatprep.mubr.f32.mxu0 0.0
        %495 = vmatmul.mubr.f32.gmra.mrb[0].mxu0 %v428
        %v496 = vpop.f32.mrb[0].mxu0
        %v497 = vadd.f32 %v425, %v496
        %v498 = vpop.f32.mrb[0].mxu0
        %499 = vdwg.mxu0
        %s500 = scalar_lea.vmem [#allocation8], 64
        %v501 = vld [vmem:[%s500] sm:$0xff]
        %v502 = vld [vmem:[%s500 + $0x8] sm:$0xff]
        %v503 = vld [vmem:[%s500 + $0x10] sm:$0xff]
        %v504 = vld [vmem:[%s500 + $0x18] sm:$0xff]
        %s505 = scalar_lea.vmem %s4, 2
        %v506 = vld [vmem:[%s505] sm:$0x1]
        %v508 = vlaneseq
        %v509 = vshrl.u32 %v508, 7
        %v510 = vsub.s32 0, %v509
        %v511 = vrot.slane %v506, %v510
        %v514 = vsel %vm340, %v328, 0
        %516 = vmatprep.subr.mxu0 0.0
        %517 = vmatpush1.msra.mxu0 %v501
        %518 = vmatprep.subr.mxu0 0.0
        %519 = vmatpush1.msra.mxu0 %v502
        %520 = vmatprep.subr.mxu0 0.0
        %521 = vmatpush1.msra.mxu0 %v503
        %522 = vmatprep.subr.mxu0 0.0
        %523 = vmatpush1.msra.mxu0 %v504
        %524 = vmatprep.subr.mxu0 0.0
        %525 = vmatpush1.msra.mxu0 0.0
        %526 = vmatprep.subr.mxu0 0.0
        %527 = vmatpush1.msra.mxu0 0.0
        %528 = vmatprep.subr.mxu0 0.0
        %529 = vmatpush1.msra.mxu0 0.0
        %530 = vmatprep.subr.mxu0 0.0
        %531 = vmatpush1.msra.mxu0 0.0
        %532 = vmatprep.subr.mxu0 0.0
        %533 = vmatpush1.msra.mxu0 0.0
        %534 = vmatprep.subr.mxu0 0.0
        %535 = vmatpush1.msra.mxu0 0.0
        %536 = vmatprep.subr.mxu0 0.0
        %537 = vmatpush1.msra.mxu0 0.0
        %538 = vmatprep.subr.mxu0 0.0
        %539 = vmatpush1.msra.mxu0 0.0
        %540 = vmatprep.subr.mxu0 0.0
        %541 = vmatpush1.msra.mxu0 0.0
        %542 = vmatprep.subr.mxu0 0.0
        %543 = vmatpush1.msra.mxu0 0.0
        %544 = vmatprep.subr.mxu0 0.0
        %545 = vmatpush1.msra.mxu0 0.0
        %546 = vmatprep.subr.mxu0 0.0
        %547 = vmatpush1.msra.mxu0 0.0
        %548 = vmatprep.subr.mxu0 0.0
        %549 = vmatpush1.msra.mxu0 0.0
        %550 = vmatprep.subr.mxu0 0.0
        %551 = vmatpush1.msra.mxu0 0.0
        %552 = vmatprep.subr.mxu0 0.0
        %553 = vmatpush1.msra.mxu0 0.0
        %554 = vmatprep.subr.mxu0 0.0
        %555 = vmatpush1.msra.mxu0 0.0
        %556 = vmatprep.subr.mxu0 0.0
        %557 = vmatpush1.msra.mxu0 0.0
        %558 = vmatprep.subr.mxu0 0.0
        %559 = vmatpush1.msra.mxu0 0.0
        %560 = vmatprep.subr.mxu0 0.0
        %561 = vmatpush1.msra.mxu0 0.0
        %562 = vmatprep.subr.mxu0 0.0
        %563 = vmatpush1.msra.mxu0 0.0
        %564 = vmatprep.subr.mxu0 0.0
        %565 = vmatpush1.msra.mxu0 0.0
        %566 = vmatprep.subr.mxu0 0.0
        %567 = vmatpush1.msra.mxu0 0.0
        %568 = vmatprep.subr.mxu0 0.0
        %569 = vmatpush1.msra.mxu0 0.0
        %570 = vmatprep.subr.mxu0 0.0
        %571 = vmatpush1.msra.mxu0 0.0
        %572 = vmatprep.subr.mxu0 0.0
        %573 = vmatpush1.msra.mxu0 0.0
        %574 = vmatprep.subr.mxu0 0.0
        %575 = vmatpush1.msra.mxu0 0.0
        %576 = vmatprep.subr.mxu0 0.0
        %577 = vmatpush1.msra.mxu0 0.0
        %578 = vmatprep.subr.mxu0 0.0
        %579 = vmatpush1.msra.mxu0 0.0
        %580 = vmatprep.mubr.f32.mxu0 0.0
        %581 = vmatmul.mubr.f32.gmra.mrb[0].mxu0 %v514
        %v582 = vpop.f32.mrb[0].mxu0
        %v583 = vadd.f32 %v511, %v582
        %v584 = vpop.f32.mrb[0].mxu0
        %585 = vdwg.mxu0
        %587 = vrot.lane.b32.xlu0 %v411, 120
        %v588 = vpop.permute.xlu0 %587
        %589 = vrot.lane.b32.xlu0 %v411, 112
        %v590 = vpop.permute.xlu0 %589
        %591 = vrot.lane.b32.xlu0 %v411, 104
        %v592 = vpop.permute.xlu0 %591
        %594 = vrot.lane.b32.xlu0 %v497, 120
        %v595 = vpop.permute.xlu0 %594
        %596 = vrot.lane.b32.xlu0 %v497, 112
        %v597 = vpop.permute.xlu0 %596
        %598 = vrot.lane.b32.xlu0 %v497, 104
        %v599 = vpop.permute.xlu0 %598
        %601 = vrot.lane.b32.xlu0 %v583, 120
        %v602 = vpop.permute.xlu0 %601
        %604 = vrot.lane.b32.xlu0 %v583, 112
        %v605 = vpop.permute.xlu0 %604
        %607 = vrot.lane.b32.xlu0 %v583, 104
        %v608 = vpop.permute.xlu0 %607
        %vm610 = vcmask 64512
        %v611 = vsel %vm610, %v411, 0
        %v613 = vsel %vm610, %v497, 0
        %615 = vmatprep.subr.mxu0 0.0
        %616 = vmatpush1.xpose.msra.mxu0 %v613
        %617 = vmatprep.subr.mxu0 0.0
        %618 = vmatpush1.xpose.msra.mxu0 0.0
        %619 = vmatprep.subr.mxu0 0.0
        %620 = vmatpush1.xpose.msra.mxu0 0.0
        %621 = vmatprep.subr.mxu0 0.0
        %622 = vmatpush1.xpose.msra.mxu0 0.0
        %623 = vmatprep.subr.mxu0 0.0
        %624 = vmatpush1.xpose.msra.mxu0 0.0
        %625 = vmatprep.subr.mxu0 0.0
        %626 = vmatpush1.xpose.msra.mxu0 0.0
        %627 = vmatprep.subr.mxu0 0.0
        %628 = vmatpush1.xpose.msra.mxu0 0.0
        %629 = vmatprep.subr.mxu0 0.0
        %630 = vmatpush1.xpose.msra.mxu0 0.0
        %631 = vmatprep.subr.mxu0 0.0
        %632 = vmatpush1.xpose.msra.mxu0 0.0
        %633 = vmatprep.subr.mxu0 0.0
        %634 = vmatpush1.xpose.msra.mxu0 0.0
        %635 = vmatprep.subr.mxu0 0.0
        %636 = vmatpush1.xpose.msra.mxu0 0.0
        %637 = vmatprep.subr.mxu0 0.0
        %638 = vmatpush1.xpose.msra.mxu0 0.0
        %639 = vmatprep.subr.mxu0 0.0
        %640 = vmatpush1.xpose.msra.mxu0 0.0
        %641 = vmatprep.subr.mxu0 0.0
        %642 = vmatpush1.xpose.msra.mxu0 0.0
        %643 = vmatprep.subr.mxu0 0.0
        %644 = vmatpush1.xpose.msra.mxu0 0.0
        %645 = vmatprep.subr.mxu0 0.0
        %646 = vmatpush1.xpose.msra.mxu0 0.0
        %647 = vmatprep.subr.mxu0 0.0
        %648 = vmatpush1.xpose.msra.mxu0 0.0
        %649 = vmatprep.subr.mxu0 0.0
        %650 = vmatpush1.xpose.msra.mxu0 0.0
        %651 = vmatprep.subr.mxu0 0.0
        %652 = vmatpush1.xpose.msra.mxu0 0.0
        %653 = vmatprep.subr.mxu0 0.0
        %654 = vmatpush1.xpose.msra.mxu0 0.0
        %655 = vmatprep.subr.mxu0 0.0
        %656 = vmatpush1.xpose.msra.mxu0 0.0
        %657 = vmatprep.subr.mxu0 0.0
        %658 = vmatpush1.xpose.msra.mxu0 0.0
        %659 = vmatprep.subr.mxu0 0.0
        %660 = vmatpush1.xpose.msra.mxu0 0.0
        %661 = vmatprep.subr.mxu0 0.0
        %662 = vmatpush1.xpose.msra.mxu0 0.0
        %663 = vmatprep.subr.mxu0 0.0
        %664 = vmatpush1.xpose.msra.mxu0 0.0
        %665 = vmatprep.subr.mxu0 0.0
        %666 = vmatpush1.xpose.msra.mxu0 0.0
        %667 = vmatprep.subr.mxu0 0.0
        %668 = vmatpush1.xpose.msra.mxu0 0.0
        %669 = vmatprep.subr.mxu0 0.0
        %670 = vmatpush1.xpose.msra.mxu0 0.0
        %671 = vmatprep.subr.mxu0 0.0
        %672 = vmatpush1.xpose.msra.mxu0 0.0
        %673 = vmatprep.subr.mxu0 0.0
        %674 = vmatpush1.xpose.msra.mxu0 0.0
        %675 = vmatprep.subr.mxu0 0.0
        %676 = vmatpush1.xpose.msra.mxu0 0.0
        %677 = vmatprep.subr.mxu0 0.0
        %678 = vmatpush1.xpose.msra.mxu0 0.0
        %679 = vmatprep.mubr.f32.mxu0 0.0
        %680 = vmatmul.mubr.f32.gmra.mrb[0].mxu0 %v611
        %v681 = vpop.f32.mrb[0].mxu0
        %v682 = vadd.f32 0.0, %v681
        %v683 = vpop.f32.mrb[0].mxu0
        %684 = vdwg.mxu0
        %v685 = vsel %vm610, %v588, 0
        %v687 = vsel %vm610, %v595, 0
        %689 = vmatprep.subr.mxu0 0.0
        %690 = vmatpush1.xpose.msra.mxu0 %v687
        %691 = vmatprep.subr.mxu0 0.0
        %692 = vmatpush1.xpose.msra.mxu0 0.0
        %693 = vmatprep.subr.mxu0 0.0
        %694 = vmatpush1.xpose.msra.mxu0 0.0
        %695 = vmatprep.subr.mxu0 0.0
        %696 = vmatpush1.xpose.msra.mxu0 0.0
        %697 = vmatprep.subr.mxu0 0.0
        %698 = vmatpush1.xpose.msra.mxu0 0.0
        %699 = vmatprep.subr.mxu0 0.0
        %700 = vmatpush1.xpose.msra.mxu0 0.0
        %701 = vmatprep.subr.mxu0 0.0
        %702 = vmatpush1.xpose.msra.mxu0 0.0
        %703 = vmatprep.subr.mxu0 0.0
        %704 = vmatpush1.xpose.msra.mxu0 0.0
        %705 = vmatprep.subr.mxu0 0.0
        %706 = vmatpush1.xpose.msra.mxu0 0.0
        %707 = vmatprep.subr.mxu0 0.0
        %708 = vmatpush1.xpose.msra.mxu0 0.0
        %709 = vmatprep.subr.mxu0 0.0
        %710 = vmatpush1.xpose.msra.mxu0 0.0
        %711 = vmatprep.subr.mxu0 0.0
        %712 = vmatpush1.xpose.msra.mxu0 0.0
        %713 = vmatprep.subr.mxu0 0.0
        %714 = vmatpush1.xpose.msra.mxu0 0.0
        %715 = vmatprep.subr.mxu0 0.0
        %716 = vmatpush1.xpose.msra.mxu0 0.0
        %717 = vmatprep.subr.mxu0 0.0
        %718 = vmatpush1.xpose.msra.mxu0 0.0
        %719 = vmatprep.subr.mxu0 0.0
        %720 = vmatpush1.xpose.msra.mxu0 0.0
        %721 = vmatprep.subr.mxu0 0.0
        %722 = vmatpush1.xpose.msra.mxu0 0.0
        %723 = vmatprep.subr.mxu0 0.0
        %724 = vmatpush1.xpose.msra.mxu0 0.0
        %725 = vmatprep.subr.mxu0 0.0
        %726 = vmatpush1.xpose.msra.mxu0 0.0
        %727 = vmatprep.subr.mxu0 0.0
        %728 = vmatpush1.xpose.msra.mxu0 0.0
        %729 = vmatprep.subr.mxu0 0.0
        %730 = vmatpush1.xpose.msra.mxu0 0.0
        %731 = vmatprep.subr.mxu0 0.0
        %732 = vmatpush1.xpose.msra.mxu0 0.0
        %733 = vmatprep.subr.mxu0 0.0
        %734 = vmatpush1.xpose.msra.mxu0 0.0
        %735 = vmatprep.subr.mxu0 0.0
        %736 = vmatpush1.xpose.msra.mxu0 0.0
        %737 = vmatprep.subr.mxu0 0.0
        %738 = vmatpush1.xpose.msra.mxu0 0.0
        %739 = vmatprep.subr.mxu0 0.0
        %740 = vmatpush1.xpose.msra.mxu0 0.0
        %741 = vmatprep.subr.mxu0 0.0
        %742 = vmatpush1.xpose.msra.mxu0 0.0
        %743 = vmatprep.subr.mxu0 0.0
        %744 = vmatpush1.xpose.msra.mxu0 0.0
        %745 = vmatprep.subr.mxu0 0.0
        %746 = vmatpush1.xpose.msra.mxu0 0.0
        %747 = vmatprep.subr.mxu0 0.0
        %748 = vmatpush1.xpose.msra.mxu0 0.0
        %749 = vmatprep.subr.mxu0 0.0
        %750 = vmatpush1.xpose.msra.mxu0 0.0
        %751 = vmatprep.subr.mxu0 0.0
        %752 = vmatpush1.xpose.msra.mxu0 0.0
        %753 = vmatprep.mubr.f32.mxu0 0.0
        %754 = vmatmul.mubr.f32.gmra.mrb[0].mxu0 %v685
        %v755 = vpop.f32.mrb[0].mxu0
        %v756 = vadd.f32 0.0, %v755
        %v757 = vpop.f32.mrb[0].mxu0
        %758 = vdwg.mxu0
        %v759 = vsel %vm610, %v590, 0
        %v761 = vsel %vm610, %v597, 0
        %763 = vmatprep.subr.mxu0 0.0
        %764 = vmatpush1.xpose.msra.mxu0 %v761
        %765 = vmatprep.subr.mxu0 0.0
        %766 = vmatpush1.xpose.msra.mxu0 0.0
        %767 = vmatprep.subr.mxu0 0.0
        %768 = vmatpush1.xpose.msra.mxu0 0.0
        %769 = vmatprep.subr.mxu0 0.0
        %770 = vmatpush1.xpose.msra.mxu0 0.0
        %771 = vmatprep.subr.mxu0 0.0
        %772 = vmatpush1.xpose.msra.mxu0 0.0
        %773 = vmatprep.subr.mxu0 0.0
        %774 = vmatpush1.xpose.msra.mxu0 0.0
        %775 = vmatprep.subr.mxu0 0.0
        %776 = vmatpush1.xpose.msra.mxu0 0.0
        %777 = vmatprep.subr.mxu0 0.0
        %778 = vmatpush1.xpose.msra.mxu0 0.0
        %779 = vmatprep.subr.mxu0 0.0
        %780 = vmatpush1.xpose.msra.mxu0 0.0
        %781 = vmatprep.subr.mxu0 0.0
        %782 = vmatpush1.xpose.msra.mxu0 0.0
        %783 = vmatprep.subr.mxu0 0.0
        %784 = vmatpush1.xpose.msra.mxu0 0.0
        %785 = vmatprep.subr.mxu0 0.0
        %786 = vmatpush1.xpose.msra.mxu0 0.0
        %787 = vmatprep.subr.mxu0 0.0
        %788 = vmatpush1.xpose.msra.mxu0 0.0
        %789 = vmatprep.subr.mxu0 0.0
        %790 = vmatpush1.xpose.msra.mxu0 0.0
        %791 = vmatprep.subr.mxu0 0.0
        %792 = vmatpush1.xpose.msra.mxu0 0.0
        %793 = vmatprep.subr.mxu0 0.0
        %794 = vmatpush1.xpose.msra.mxu0 0.0
        %795 = vmatprep.subr.mxu0 0.0
        %796 = vmatpush1.xpose.msra.mxu0 0.0
        %797 = vmatprep.subr.mxu0 0.0
        %798 = vmatpush1.xpose.msra.mxu0 0.0
        %799 = vmatprep.subr.mxu0 0.0
        %800 = vmatpush1.xpose.msra.mxu0 0.0
        %801 = vmatprep.subr.mxu0 0.0
        %802 = vmatpush1.xpose.msra.mxu0 0.0
        %803 = vmatprep.subr.mxu0 0.0
        %804 = vmatpush1.xpose.msra.mxu0 0.0
        %805 = vmatprep.subr.mxu0 0.0
        %806 = vmatpush1.xpose.msra.mxu0 0.0
        %807 = vmatprep.subr.mxu0 0.0
        %808 = vmatpush1.xpose.msra.mxu0 0.0
        %809 = vmatprep.subr.mxu0 0.0
        %810 = vmatpush1.xpose.msra.mxu0 0.0
        %811 = vmatprep.subr.mxu0 0.0
        %812 = vmatpush1.xpose.msra.mxu0 0.0
        %813 = vmatprep.subr.mxu0 0.0
        %814 = vmatpush1.xpose.msra.mxu0 0.0
        %815 = vmatprep.subr.mxu0 0.0
        %816 = vmatpush1.xpose.msra.mxu0 0.0
        %817 = vmatprep.subr.mxu0 0.0
        %818 = vmatpush1.xpose.msra.mxu0 0.0
        %819 = vmatprep.subr.mxu0 0.0
        %820 = vmatpush1.xpose.msra.mxu0 0.0
        %821 = vmatprep.subr.mxu0 0.0
        %822 = vmatpush1.xpose.msra.mxu0 0.0
        %823 = vmatprep.subr.mxu0 0.0
        %824 = vmatpush1.xpose.msra.mxu0 0.0
        %825 = vmatprep.subr.mxu0 0.0
        %826 = vmatpush1.xpose.msra.mxu0 0.0
        %827 = vmatprep.mubr.f32.mxu0 0.0
        %828 = vmatmul.mubr.f32.gmra.mrb[0].mxu0 %v759
        %v829 = vpop.f32.mrb[0].mxu0
        %v830 = vadd.f32 0.0, %v829
        %v831 = vpop.f32.mrb[0].mxu0
        %832 = vdwg.mxu0
        %v833 = vsel %vm610, %v592, 0
        %v835 = vsel %vm610, %v599, 0
        %837 = vmatprep.subr.mxu0 0.0
        %838 = vmatpush1.xpose.msra.mxu0 %v835
        %839 = vmatprep.subr.mxu0 0.0
        %840 = vmatpush1.xpose.msra.mxu0 0.0
        %841 = vmatprep.subr.mxu0 0.0
        %842 = vmatpush1.xpose.msra.mxu0 0.0
        %843 = vmatprep.subr.mxu0 0.0
        %844 = vmatpush1.xpose.msra.mxu0 0.0
        %845 = vmatprep.subr.mxu0 0.0
        %846 = vmatpush1.xpose.msra.mxu0 0.0
        %847 = vmatprep.subr.mxu0 0.0
        %848 = vmatpush1.xpose.msra.mxu0 0.0
        %849 = vmatprep.subr.mxu0 0.0
        %850 = vmatpush1.xpose.msra.mxu0 0.0
        %851 = vmatprep.subr.mxu0 0.0
        %852 = vmatpush1.xpose.msra.mxu0 0.0
        %853 = vmatprep.subr.mxu0 0.0
        %854 = vmatpush1.xpose.msra.mxu0 0.0
        %855 = vmatprep.subr.mxu0 0.0
        %856 = vmatpush1.xpose.msra.mxu0 0.0
        %857 = vmatprep.subr.mxu0 0.0
        %858 = vmatpush1.xpose.msra.mxu0 0.0
        %859 = vmatprep.subr.mxu0 0.0
        %860 = vmatpush1.xpose.msra.mxu0 0.0
        %861 = vmatprep.subr.mxu0 0.0
        %862 = vmatpush1.xpose.msra.mxu0 0.0
        %863 = vmatprep.subr.mxu0 0.0
        %864 = vmatpush1.xpose.msra.mxu0 0.0
        %865 = vmatprep.subr.mxu0 0.0
        %866 = vmatpush1.xpose.msra.mxu0 0.0
        %867 = vmatprep.subr.mxu0 0.0
        %868 = vmatpush1.xpose.msra.mxu0 0.0
        %869 = vmatprep.subr.mxu0 0.0
        %870 = vmatpush1.xpose.msra.mxu0 0.0
        %871 = vmatprep.subr.mxu0 0.0
        %872 = vmatpush1.xpose.msra.mxu0 0.0
        %873 = vmatprep.subr.mxu0 0.0
        %874 = vmatpush1.xpose.msra.mxu0 0.0
        %875 = vmatprep.subr.mxu0 0.0
        %876 = vmatpush1.xpose.msra.mxu0 0.0
        %877 = vmatprep.subr.mxu0 0.0
        %878 = vmatpush1.xpose.msra.mxu0 0.0
        %879 = vmatprep.subr.mxu0 0.0
        %880 = vmatpush1.xpose.msra.mxu0 0.0
        %881 = vmatprep.subr.mxu0 0.0
        %882 = vmatpush1.xpose.msra.mxu0 0.0
        %883 = vmatprep.subr.mxu0 0.0
        %884 = vmatpush1.xpose.msra.mxu0 0.0
        %885 = vmatprep.subr.mxu0 0.0
        %886 = vmatpush1.xpose.msra.mxu0 0.0
        %887 = vmatprep.subr.mxu0 0.0
        %888 = vmatpush1.xpose.msra.mxu0 0.0
        %889 = vmatprep.subr.mxu0 0.0
        %890 = vmatpush1.xpose.msra.mxu0 0.0
        %891 = vmatprep.subr.mxu0 0.0
        %892 = vmatpush1.xpose.msra.mxu0 0.0
        %893 = vmatprep.subr.mxu0 0.0
        %894 = vmatpush1.xpose.msra.mxu0 0.0
        %895 = vmatprep.subr.mxu0 0.0
        %896 = vmatpush1.xpose.msra.mxu0 0.0
        %897 = vmatprep.subr.mxu0 0.0
        %898 = vmatpush1.xpose.msra.mxu0 0.0
        %899 = vmatprep.subr.mxu0 0.0
        %900 = vmatpush1.xpose.msra.mxu0 0.0
        %901 = vmatprep.mubr.f32.mxu0 0.0
        %902 = vmatmul.mubr.f32.gmra.mrb[0].mxu0 %v833
        %v903 = vpop.f32.mrb[0].mxu0
        %v904 = vadd.f32 0.0, %v903
        %v905 = vpop.f32.mrb[0].mxu0
        %906 = vdwg.mxu0
        %v907 = vsel %vm610, %v682, -inf
        %908 = vmax.xlane.f32.xlu0 %v907
        %v909 = vpop.xlane.xlu0 %908
        %v910 = vsel %vm610, %v756, -inf
        %911 = vmax.xlane.f32.xlu0 %v910
        %v912 = vpop.xlane.xlu0 %911
        %v913 = vsel %vm610, %v830, -inf
        %914 = vmax.xlane.f32.xlu0 %v913
        %v915 = vpop.xlane.xlu0 %914
        %v916 = vsel %vm610, %v904, -inf
        %917 = vmax.xlane.f32.xlu0 %v916
        %v918 = vpop.xlane.xlu0 %917
        %v919 = vsub.f32 %v682, %v909
        %v920 = vsub.f32 %v756, %v912
        %v921 = vsub.f32 %v830, %v915
        %v922 = vsub.f32 %v904, %v918
        %v923 = vmul.f32 %v919, 1.442695
        %v924 = vpow.pop %v923
        %v925 = vmul.f32 %v920, 1.442695
        %v926 = vpow.pop %v925
        %v927 = vmul.f32 %v921, 1.442695
        %v928 = vpow.pop %v927
        %v929 = vmul.f32 %v922, 1.442695
        %v930 = vpow.pop %v929
        %v931 = vsel %vm610, %v924, 0.0
        %932 = vadd.xlane.f32.xlu0 %v931
        %v933 = vpop.xlane.xlu0 %932
        %v934 = vsel %vm610, %v926, 0.0
        %935 = vadd.xlane.f32.xlu0 %v934
        %v936 = vpop.xlane.xlu0 %935
        %v937 = vsel %vm610, %v928, 0.0
        %938 = vadd.xlane.f32.xlu0 %v937
        %v939 = vpop.xlane.xlu0 %938
        %v940 = vsel %vm610, %v930, 0.0
        %941 = vadd.xlane.f32.xlu0 %v940
        %v942 = vpop.xlane.xlu0 %941
        %v943 = vrcp.pop %v933
        %v944 = vmul.f32 %v924, %v943
        %v945 = vrcp.pop %v936
        %v946 = vmul.f32 %v926, %v945
        %v947 = vrcp.pop %v939
        %v948 = vmul.f32 %v928, %v947
        %v949 = vrcp.pop %v942
        %v950 = vmul.f32 %v930, %v949
        %v952 = vsel %vm610, %v944, 0
        %954 = vmatprep.subr.mxu0 0.0
        %955 = vmatpush1.msra.mxu0 %v583
        %956 = vmatprep.subr.mxu0 0.0
        %957 = vmatpush1.msra.mxu0 0.0
        %958 = vmatprep.subr.mxu0 0.0
        %959 = vmatpush1.msra.mxu0 0.0
        %960 = vmatprep.subr.mxu0 0.0
        %961 = vmatpush1.msra.mxu0 0.0
        %962 = vmatprep.subr.mxu0 0.0
        %963 = vmatpush1.msra.mxu0 0.0
        %964 = vmatprep.subr.mxu0 0.0
        %965 = vmatpush1.msra.mxu0 0.0
        %966 = vmatprep.subr.mxu0 0.0
        %967 = vmatpush1.msra.mxu0 0.0
        %968 = vmatprep.subr.mxu0 0.0
        %969 = vmatpush1.msra.mxu0 0.0
        %970 = vmatprep.subr.mxu0 0.0
        %971 = vmatpush1.msra.mxu0 0.0
        %972 = vmatprep.subr.mxu0 0.0
        %973 = vmatpush1.msra.mxu0 0.0
        %974 = vmatprep.subr.mxu0 0.0
        %975 = vmatpush1.msra.mxu0 0.0
        %976 = vmatprep.subr.mxu0 0.0
        %977 = vmatpush1.msra.mxu0 0.0
        %978 = vmatprep.subr.mxu0 0.0
        %979 = vmatpush1.msra.mxu0 0.0
        %980 = vmatprep.subr.mxu0 0.0
        %981 = vmatpush1.msra.mxu0 0.0
        %982 = vmatprep.subr.mxu0 0.0
        %983 = vmatpush1.msra.mxu0 0.0
        %984 = vmatprep.subr.mxu0 0.0
        %985 = vmatpush1.msra.mxu0 0.0
        %986 = vmatprep.subr.mxu0 0.0
        %987 = vmatpush1.msra.mxu0 0.0
        %988 = vmatprep.subr.mxu0 0.0
        %989 = vmatpush1.msra.mxu0 0.0
        %990 = vmatprep.subr.mxu0 0.0
        %991 = vmatpush1.msra.mxu0 0.0
        %992 = vmatprep.subr.mxu0 0.0
        %993 = vmatpush1.msra.mxu0 0.0
        %994 = vmatprep.subr.mxu0 0.0
        %995 = vmatpush1.msra.mxu0 0.0
        %996 = vmatprep.subr.mxu0 0.0
        %997 = vmatpush1.msra.mxu0 0.0
        %998 = vmatprep.subr.mxu0 0.0
        %999 = vmatpush1.msra.mxu0 0.0
        %1000 = vmatprep.subr.mxu0 0.0
        %1001 = vmatpush1.msra.mxu0 0.0
        %1002 = vmatprep.subr.mxu0 0.0
        %1003 = vmatpush1.msra.mxu0 0.0
        %1004 = vmatprep.subr.mxu0 0.0
        %1005 = vmatpush1.msra.mxu0 0.0
        %1006 = vmatprep.subr.mxu0 0.0
        %1007 = vmatpush1.msra.mxu0 0.0
        %1008 = vmatprep.subr.mxu0 0.0
        %1009 = vmatpush1.msra.mxu0 0.0
        %1010 = vmatprep.subr.mxu0 0.0
        %1011 = vmatpush1.msra.mxu0 0.0
        %1012 = vmatprep.subr.mxu0 0.0
        %1013 = vmatpush1.msra.mxu0 0.0
        %1014 = vmatprep.subr.mxu0 0.0
        %1015 = vmatpush1.msra.mxu0 0.0
        %1016 = vmatprep.subr.mxu0 0.0
        %1017 = vmatpush1.msra.mxu0 0.0
        %1018 = vmatprep.mubr.f32.mxu0 0.0
        %1019 = vmatmul.mubr.f32.gmra.mrb[0].mxu0 %v952
        %v1020 = vpop.f32.mrb[0].mxu0
        %v1021 = vadd.f32 0.0, %v1020
        %v1022 = vpop.f32.mrb[0].mxu0
        %1023 = vdwg.mxu0
        %v1025 = vsel %vm610, %v946, 0
        %1027 = vmatprep.subr.mxu0 0.0
        %1028 = vmatpush1.msra.mxu0 %v602
        %1029 = vmatprep.subr.mxu0 0.0
        %1030 = vmatpush1.msra.mxu0 0.0
        %1031 = vmatprep.subr.mxu0 0.0
        %1032 = vmatpush1.msra.mxu0 0.0
        %1033 = vmatprep.subr.mxu0 0.0
        %1034 = vmatpush1.msra.mxu0 0.0
        %1035 = vmatprep.subr.mxu0 0.0
        %1036 = vmatpush1.msra.mxu0 0.0
        %1037 = vmatprep.subr.mxu0 0.0
        %1038 = vmatpush1.msra.mxu0 0.0
        %1039 = vmatprep.subr.mxu0 0.0
        %1040 = vmatpush1.msra.mxu0 0.0
        %1041 = vmatprep.subr.mxu0 0.0
        %1042 = vmatpush1.msra.mxu0 0.0
        %1043 = vmatprep.subr.mxu0 0.0
        %1044 = vmatpush1.msra.mxu0 0.0
        %1045 = vmatprep.subr.mxu0 0.0
        %1046 = vmatpush1.msra.mxu0 0.0
        %1047 = vmatprep.subr.mxu0 0.0
        %1048 = vmatpush1.msra.mxu0 0.0
        %1049 = vmatprep.subr.mxu0 0.0
        %1050 = vmatpush1.msra.mxu0 0.0
        %1051 = vmatprep.subr.mxu0 0.0
        %1052 = vmatpush1.msra.mxu0 0.0
        %1053 = vmatprep.subr.mxu0 0.0
        %1054 = vmatpush1.msra.mxu0 0.0
        %1055 = vmatprep.subr.mxu0 0.0
        %1056 = vmatpush1.msra.mxu0 0.0
        %1057 = vmatprep.subr.mxu0 0.0
        %1058 = vmatpush1.msra.mxu0 0.0
        %1059 = vmatprep.subr.mxu0 0.0
        %1060 = vmatpush1.msra.mxu0 0.0
        %1061 = vmatprep.subr.mxu0 0.0
        %1062 = vmatpush1.msra.mxu0 0.0
        %1063 = vmatprep.subr.mxu0 0.0
        %1064 = vmatpush1.msra.mxu0 0.0
        %1065 = vmatprep.subr.mxu0 0.0
        %1066 = vmatpush1.msra.mxu0 0.0
        %1067 = vmatprep.subr.mxu0 0.0
        %1068 = vmatpush1.msra.mxu0 0.0
        %1069 = vmatprep.subr.mxu0 0.0
        %1070 = vmatpush1.msra.mxu0 0.0
        %1071 = vmatprep.subr.mxu0 0.0
        %1072 = vmatpush1.msra.mxu0 0.0
        %1073 = vmatprep.subr.mxu0 0.0
        %1074 = vmatpush1.msra.mxu0 0.0
        %1075 = vmatprep.subr.mxu0 0.0
        %1076 = vmatpush1.msra.mxu0 0.0
        %1077 = vmatprep.subr.mxu0 0.0
        %1078 = vmatpush1.msra.mxu0 0.0
        %1079 = vmatprep.subr.mxu0 0.0
        %1080 = vmatpush1.msra.mxu0 0.0
        %1081 = vmatprep.subr.mxu0 0.0
        %1082 = vmatpush1.msra.mxu0 0.0
        %1083 = vmatprep.subr.mxu0 0.0
        %1084 = vmatpush1.msra.mxu0 0.0
        %1085 = vmatprep.subr.mxu0 0.0
        %1086 = vmatpush1.msra.mxu0 0.0
        %1087 = vmatprep.subr.mxu0 0.0
        %1088 = vmatpush1.msra.mxu0 0.0
        %1089 = vmatprep.subr.mxu0 0.0
        %1090 = vmatpush1.msra.mxu0 0.0
        %1091 = vmatprep.mubr.f32.mxu0 0.0
        %1092 = vmatmul.mubr.f32.gmra.mrb[0].mxu0 %v1025
        %v1093 = vpop.f32.mrb[0].mxu0
        %v1094 = vadd.f32 0.0, %v1093
        %v1095 = vpop.f32.mrb[0].mxu0
        %1096 = vdwg.mxu0
        %v1098 = vsel %vm610, %v948, 0
        %1100 = vmatprep.subr.mxu0 0.0
        %1101 = vmatpush1.msra.mxu0 %v605
        %1102 = vmatprep.subr.mxu0 0.0
        %1103 = vmatpush1.msra.mxu0 0.0
        %1104 = vmatprep.subr.mxu0 0.0
        %1105 = vmatpush1.msra.mxu0 0.0
        %1106 = vmatprep.subr.mxu0 0.0
        %1107 = vmatpush1.msra.mxu0 0.0
        %1108 = vmatprep.subr.mxu0 0.0
        %1109 = vmatpush1.msra.mxu0 0.0
        %1110 = vmatprep.subr.mxu0 0.0
        %1111 = vmatpush1.msra.mxu0 0.0
        %1112 = vmatprep.subr.mxu0 0.0
        %1113 = vmatpush1.msra.mxu0 0.0
        %1114 = vmatprep.subr.mxu0 0.0
        %1115 = vmatpush1.msra.mxu0 0.0
        %1116 = vmatprep.subr.mxu0 0.0
        %1117 = vmatpush1.msra.mxu0 0.0
        %1118 = vmatprep.subr.mxu0 0.0
        %1119 = vmatpush1.msra.mxu0 0.0
        %1120 = vmatprep.subr.mxu0 0.0
        %1121 = vmatpush1.msra.mxu0 0.0
        %1122 = vmatprep.subr.mxu0 0.0
        %1123 = vmatpush1.msra.mxu0 0.0
        %1124 = vmatprep.subr.mxu0 0.0
        %1125 = vmatpush1.msra.mxu0 0.0
        %1126 = vmatprep.subr.mxu0 0.0
        %1127 = vmatpush1.msra.mxu0 0.0
        %1128 = vmatprep.subr.mxu0 0.0
        %1129 = vmatpush1.msra.mxu0 0.0
        %1130 = vmatprep.subr.mxu0 0.0
        %1131 = vmatpush1.msra.mxu0 0.0
        %1132 = vmatprep.subr.mxu0 0.0
        %1133 = vmatpush1.msra.mxu0 0.0
        %1134 = vmatprep.subr.mxu0 0.0
        %1135 = vmatpush1.msra.mxu0 0.0
        %1136 = vmatprep.subr.mxu0 0.0
        %1137 = vmatpush1.msra.mxu0 0.0
        %1138 = vmatprep.subr.mxu0 0.0
        %1139 = vmatpush1.msra.mxu0 0.0
        %1140 = vmatprep.subr.mxu0 0.0
        %1141 = vmatpush1.msra.mxu0 0.0
        %1142 = vmatprep.subr.mxu0 0.0
        %1143 = vmatpush1.msra.mxu0 0.0
        %1144 = vmatprep.subr.mxu0 0.0
        %1145 = vmatpush1.msra.mxu0 0.0
        %1146 = vmatprep.subr.mxu0 0.0
        %1147 = vmatpush1.msra.mxu0 0.0
        %1148 = vmatprep.subr.mxu0 0.0
        %1149 = vmatpush1.msra.mxu0 0.0
        %1150 = vmatprep.subr.mxu0 0.0
        %1151 = vmatpush1.msra.mxu0 0.0
        %1152 = vmatprep.subr.mxu0 0.0
        %1153 = vmatpush1.msra.mxu0 0.0
        %1154 = vmatprep.subr.mxu0 0.0
        %1155 = vmatpush1.msra.mxu0 0.0
        %1156 = vmatprep.subr.mxu0 0.0
        %1157 = vmatpush1.msra.mxu0 0.0
        %1158 = vmatprep.subr.mxu0 0.0
        %1159 = vmatpush1.msra.mxu0 0.0
        %1160 = vmatprep.subr.mxu0 0.0
        %1161 = vmatpush1.msra.mxu0 0.0
        %1162 = vmatprep.subr.mxu0 0.0
        %1163 = vmatpush1.msra.mxu0 0.0
        %1164 = vmatprep.mubr.f32.mxu0 0.0
        %1165 = vmatmul.mubr.f32.gmra.mrb[0].mxu0 %v1098
        %v1166 = vpop.f32.mrb[0].mxu0
        %v1167 = vadd.f32 0.0, %v1166
        %v1168 = vpop.f32.mrb[0].mxu0
        %1169 = vdwg.mxu0
        %v1171 = vsel %vm610, %v950, 0
        %1173 = vmatprep.subr.mxu0 0.0
        %1174 = vmatpush1.msra.mxu0 %v608
        %1175 = vmatprep.subr.mxu0 0.0
        %1176 = vmatpush1.msra.mxu0 0.0
        %1177 = vmatprep.subr.mxu0 0.0
        %1178 = vmatpush1.msra.mxu0 0.0
        %1179 = vmatprep.subr.mxu0 0.0
        %1180 = vmatpush1.msra.mxu0 0.0
        %1181 = vmatprep.subr.mxu0 0.0
        %1182 = vmatpush1.msra.mxu0 0.0
        %1183 = vmatprep.subr.mxu0 0.0
        %1184 = vmatpush1.msra.mxu0 0.0
        %1185 = vmatprep.subr.mxu0 0.0
        %1186 = vmatpush1.msra.mxu0 0.0
        %1187 = vmatprep.subr.mxu0 0.0
        %1188 = vmatpush1.msra.mxu0 0.0
        %1189 = vmatprep.subr.mxu0 0.0
        %1190 = vmatpush1.msra.mxu0 0.0
        %1191 = vmatprep.subr.mxu0 0.0
        %1192 = vmatpush1.msra.mxu0 0.0
        %1193 = vmatprep.subr.mxu0 0.0
        %1194 = vmatpush1.msra.mxu0 0.0
        %1195 = vmatprep.subr.mxu0 0.0
        %1196 = vmatpush1.msra.mxu0 0.0
        %1197 = vmatprep.subr.mxu0 0.0
        %1198 = vmatpush1.msra.mxu0 0.0
        %1199 = vmatprep.subr.mxu0 0.0
        %1200 = vmatpush1.msra.mxu0 0.0
        %1201 = vmatprep.subr.mxu0 0.0
        %1202 = vmatpush1.msra.mxu0 0.0
        %1203 = vmatprep.subr.mxu0 0.0
        %1204 = vmatpush1.msra.mxu0 0.0
        %1205 = vmatprep.subr.mxu0 0.0
        %1206 = vmatpush1.msra.mxu0 0.0
        %1207 = vmatprep.subr.mxu0 0.0
        %1208 = vmatpush1.msra.mxu0 0.0
        %1209 = vmatprep.subr.mxu0 0.0
        %1210 = vmatpush1.msra.mxu0 0.0
        %1211 = vmatprep.subr.mxu0 0.0
        %1212 = vmatpush1.msra.mxu0 0.0
        %1213 = vmatprep.subr.mxu0 0.0
        %1214 = vmatpush1.msra.mxu0 0.0
        %1215 = vmatprep.subr.mxu0 0.0
        %1216 = vmatpush1.msra.mxu0 0.0
        %1217 = vmatprep.subr.mxu0 0.0
        %1218 = vmatpush1.msra.mxu0 0.0
        %1219 = vmatprep.subr.mxu0 0.0
        %1220 = vmatpush1.msra.mxu0 0.0
        %1221 = vmatprep.subr.mxu0 0.0
        %1222 = vmatpush1.msra.mxu0 0.0
        %1223 = vmatprep.subr.mxu0 0.0
        %1224 = vmatpush1.msra.mxu0 0.0
        %1225 = vmatprep.subr.mxu0 0.0
        %1226 = vmatpush1.msra.mxu0 0.0
        %1227 = vmatprep.subr.mxu0 0.0
        %1228 = vmatpush1.msra.mxu0 0.0
        %1229 = vmatprep.subr.mxu0 0.0
        %1230 = vmatpush1.msra.mxu0 0.0
        %1231 = vmatprep.subr.mxu0 0.0
        %1232 = vmatpush1.msra.mxu0 0.0
        %1233 = vmatprep.subr.mxu0 0.0
        %1234 = vmatpush1.msra.mxu0 0.0
        %1235 = vmatprep.subr.mxu0 0.0
        %1236 = vmatpush1.msra.mxu0 0.0
        %1237 = vmatprep.mubr.f32.mxu0 0.0
        %1238 = vmatmul.mubr.f32.gmra.mrb[0].mxu0 %v1171
        %v1239 = vpop.f32.mrb[0].mxu0
        %v1240 = vadd.f32 0.0, %v1239
        %v1241 = vpop.f32.mrb[0].mxu0
        %1242 = vdwg.mxu0
        %1244 = vrot.lane.b32.xlu0 %v1094, 8
        %v1245 = vpop.permute.xlu0 %1244
        %1248 = vrot.lane.b32.xlu0 %v1167, 16
        %v1249 = vpop.permute.xlu0 %1248
        %1252 = vrot.lane.b32.xlu0 %v1240, 24
        %v1253 = vpop.permute.xlu0 %1252
        %v1255 = vsel %vm610, %v1021, %v1245
        %vm1256 = vcmask 130048
        %v1257 = vsel %vm1256, %v1255, %v1249
        %vm1258 = vcmask 195584
        %v1259 = vsel %vm1258, %v1257, %v1253
        %s1260 = scalar_lea.vmem [#allocation8], 96
        %v1261 = vld [vmem:[%s1260] sm:$0xff]
        %v1262 = vld [vmem:[%s1260 + $0x8] sm:$0xff]
        %v1263 = vld [vmem:[%s1260 + $0x10] sm:$0xff]
        %v1264 = vld [vmem:[%s1260 + $0x18] sm:$0xff]
        %s1265 = scalar_lea.vmem %s4, 3
        %v1266 = vld [vmem:[%s1265] sm:$0x1]
        %v1268 = vlaneseq
        %v1269 = vshrl.u32 %v1268, 7
        %v1270 = vsub.s32 0, %v1269
        %v1271 = vrot.slane %v1266, %v1270
        %v1274 = vsel %vm340, %v1259, 0
        %1276 = vmatprep.subr.mxu0 0.0
        %1277 = vmatpush1.msra.mxu0 %v1261
        %1278 = vmatprep.subr.mxu0 0.0
        %1279 = vmatpush1.msra.mxu0 %v1262
        %1280 = vmatprep.subr.mxu0 0.0
        %1281 = vmatpush1.msra.mxu0 %v1263
        %1282 = vmatprep.subr.mxu0 0.0
        %1283 = vmatpush1.msra.mxu0 %v1264
        %1284 = vmatprep.subr.mxu0 0.0
        %1285 = vmatpush1.msra.mxu0 0.0
        %1286 = vmatprep.subr.mxu0 0.0
        %1287 = vmatpush1.msra.mxu0 0.0
        %1288 = vmatprep.subr.mxu0 0.0
        %1289 = vmatpush1.msra.mxu0 0.0
        %1290 = vmatprep.subr.mxu0 0.0
        %1291 = vmatpush1.msra.mxu0 0.0
        %1292 = vmatprep.subr.mxu0 0.0
        %1293 = vmatpush1.msra.mxu0 0.0
        %1294 = vmatprep.subr.mxu0 0.0
        %1295 = vmatpush1.msra.mxu0 0.0
        %1296 = vmatprep.subr.mxu0 0.0
        %1297 = vmatpush1.msra.mxu0 0.0
        %1298 = vmatprep.subr.mxu0 0.0
        %1299 = vmatpush1.msra.mxu0 0.0
        %1300 = vmatprep.subr.mxu0 0.0
        %1301 = vmatpush1.msra.mxu0 0.0
        %1302 = vmatprep.subr.mxu0 0.0
        %1303 = vmatpush1.msra.mxu0 0.0
        %1304 = vmatprep.subr.mxu0 0.0
        %1305 = vmatpush1.msra.mxu0 0.0
        %1306 = vmatprep.subr.mxu0 0.0
        %1307 = vmatpush1.msra.mxu0 0.0
        %1308 = vmatprep.subr.mxu0 0.0
        %1309 = vmatpush1.msra.mxu0 0.0
        %1310 = vmatprep.subr.mxu0 0.0
        %1311 = vmatpush1.msra.mxu0 0.0
        %1312 = vmatprep.subr.mxu0 0.0
        %1313 = vmatpush1.msra.mxu0 0.0
        %1314 = vmatprep.subr.mxu0 0.0
        %1315 = vmatpush1.msra.mxu0 0.0
        %1316 = vmatprep.subr.mxu0 0.0
        %1317 = vmatpush1.msra.mxu0 0.0
        %1318 = vmatprep.subr.mxu0 0.0
        %1319 = vmatpush1.msra.mxu0 0.0
        %1320 = vmatprep.subr.mxu0 0.0
        %1321 = vmatpush1.msra.mxu0 0.0
        %1322 = vmatprep.subr.mxu0 0.0
        %1323 = vmatpush1.msra.mxu0 0.0
        %1324 = vmatprep.subr.mxu0 0.0
        %1325 = vmatpush1.msra.mxu0 0.0
        %1326 = vmatprep.subr.mxu0 0.0
        %1327 = vmatpush1.msra.mxu0 0.0
        %1328 = vmatprep.subr.mxu0 0.0
        %1329 = vmatpush1.msra.mxu0 0.0
        %1330 = vmatprep.subr.mxu0 0.0
        %1331 = vmatpush1.msra.mxu0 0.0
        %1332 = vmatprep.subr.mxu0 0.0
        %1333 = vmatpush1.msra.mxu0 0.0
        %1334 = vmatprep.subr.mxu0 0.0
        %1335 = vmatpush1.msra.mxu0 0.0
        %1336 = vmatprep.subr.mxu0 0.0
        %1337 = vmatpush1.msra.mxu0 0.0
        %1338 = vmatprep.subr.mxu0 0.0
        %1339 = vmatpush1.msra.mxu0 0.0
        %1340 = vmatprep.mubr.f32.mxu0 0.0
        %1341 = vmatmul.mubr.f32.gmra.mrb[0].mxu0 %v1274
        %v1342 = vpop.f32.mrb[0].mxu0
        %v1343 = vadd.f32 %v1271, %v1342
        %v1344 = vpop.f32.mrb[0].mxu0
        %1345 = vdwg.mxu0
        %1346 = vst.msk [vmem:[%s325] sm:$0xff] %vm340, %v1343
        %s1347 = sand.u32 %s154, 1
        %s1348 = scalar_lea.sflag [#allocation4], %s1347
        %s1349 = sand.u32 %s154, 1
        %s1350 = smul.addr %s1349, 8
        %s1351 = scalar_lea.vmem [#allocation10], %s1350
        // Predicated region
        $region57: #{tpu_custom_call.1} parent=39 // pred_check
          %p1352 = pneg %p164
        $region58: #{tpu_custom_call.1} parent=39 // pred_check_branch
          %1354 = sbr.rel (%p1352) target = $region60
        $region59: #{tpu_custom_call.1} parent=39 // pred_region
          %s1356 = ssub.s32 128, 128
          %1357 = vsyncadd %s1348, %s1356
          %s1358 = smul.addr %s26, 128
          %s1359 = scalar_lea.hbm %s5, %s1358
          %s1361 = sshll.u32 %s1351, 4
          %s1362 = int_to_ptr.vmem [resolvable:$true] %s1361
          %1364 = dma.vmem_to_hbm [thread:$0]  %s1362, 128, %s1359, %s1348
        $region60: #{tpu_custom_call.1} parent=39 // pred_fallthru
          _
      $region40: #{tpu_custom_call.1} parent=5 // pred_fallthru
        _
      %p1365 = scmp.le.s32.totalorder 2, %s21
      // Predicated region
      $region61: #{tpu_custom_call.1} parent=5 // pred_check
        %p1366 = pneg %p1365
      $region62: #{tpu_custom_call.1} parent=5 // pred_check_branch
        %1368 = sbr.rel (%p1366) target = $region64
      $region63: #{tpu_custom_call.1} parent=5 // pred_region
        %s1369 = ssub.s32 %s21, 2
        // Predicated region
        $region65: #{tpu_custom_call.1} parent=63 // pred_check
          %p1370 = pneg %p170
        $region66: #{tpu_custom_call.1} parent=63 // pred_check_branch
          %1372 = sbr.rel (%p1370) target = $region68
        $region67: #{tpu_custom_call.1} parent=63 // pred_region
          %s1373 = sand.u32 %s155, 1
          %s1374 = scalar_lea.sflag [#allocation4], %s1373
          %s1375 = sand.u32 %s155, 1
          %s1376 = smul.addr %s1375, 8
          %s1377 = scalar_lea.vmem [#allocation10], %s1376
          %1378 = dma.done %s1374, 128
        $region68: #{tpu_custom_call.1} parent=63 // pred_fallthru
          _
      $region64: #{tpu_custom_call.1} parent=5 // pred_fallthru
        _
    $region6: #{tpu_custom_call.1} parent=1 // loop_footer
      %s25 = sadd.s32 1, %s21
    $region7: #{tpu_custom_call.1} parent=1 // loop_footer_branch
      %20 = sbr.rel target = $region3
    $region8: #{tpu_custom_call.1} parent=1 // loop_exit
      _
    %1379 = vsyncpa [#allocation3], 1
    %s1380 = scalar_lea.sflag [#allocation3], 1
    %1381 = vsyncpa %s1380, 1
    %1382 = vsyncpa [#allocation6], 1
    %s1383 = scalar_lea.sflag [#allocation6], 1
    %1384 = vsyncpa %s1383, 1
    %1385 = vsyncpa [#allocation9], 1
    %1386 = vsyncpa [#allocation4], 1
    %s1387 = scalar_lea.sflag [#allocation4], 1
    %1388 = vsyncpa %s1387, 1

</llo_original>
